<compile_context>
chip_gen: v7x
topology: tpu7x:2x2x1
jax: 0.10.0
libtpu: 0.0.40
codegen_flags: <defaults>
</compile_context>

<pallas_src>
import jax
import jax.numpy as jnp
from jax.experimental import pallas as pl
from jax.experimental.pallas import tpu as pltpu


def _round_up(n, m):
    return (n + m - 1) // m * m


def _mlp_kernel(x_ref, w1_ref, b1_ref, w2_ref, b2_ref, w3_ref, b3_ref, o_ref):
    x = x_ref[...]  # (TILE_B, D_pad) bf16

    # fc_1 + ReLU  (MXU bf16 matmul, f32 accumulation; epilogue in f32)
    h1 = jnp.dot(x, w1_ref[...], preferred_element_type=jnp.float32) + b1_ref[...]
    h1 = jnp.maximum(h1, 0.0).astype(jnp.bfloat16)

    # fc_2 + ReLU
    h2 = jnp.dot(h1, w2_ref[...], preferred_element_type=jnp.float32) + b2_ref[...]
    h2 = jnp.maximum(h2, 0.0).astype(jnp.bfloat16)

    # fc_3 + sigmoid (output padded to 128 lanes -> dense store; col 0 is real)
    z = jnp.dot(h2, w3_ref[...], preferred_element_type=jnp.float32) + b3_ref[...]
    e = jnp.exp(-z)                                   # EUP
    o_ref[...] = pl.reciprocal(1.0 + e, approx=True).astype(o_ref.dtype)  # EUP


def binary_classifier_forward(x, params):
    """x: [B, D] float32.  params: padded dict from init_params.  Returns [B, 1] f32."""
    B, D = x.shape
    w1, b1 = params["W1"], params["b1"]
    w2, b2 = params["W2"], params["b2"]
    w3, b3 = params["W3"], params["b3"]
    d_pad, h1p = w1.shape
    h2p = w2.shape[1]
    outp = w3.shape[1]

    # Pad batch to a bf16-friendly sublane tile; pad features with zeros.
    tile_b = min(128, _round_up(max(B, 1), 16))
    b_pad = _round_up(B, tile_b)
    xp = jnp.zeros((b_pad, d_pad), jnp.bfloat16)
    xp = xp.at[:B, :D].set(x.astype(jnp.bfloat16))

    grid = (b_pad // tile_b,)
    out = pl.pallas_call(
        _mlp_kernel,
        out_shape=jax.ShapeDtypeStruct((b_pad, outp), jnp.float32),
        grid=grid,
        in_specs=[
            pl.BlockSpec((tile_b, d_pad), lambda i: (i, 0)),   # x: tiled over batch
            pl.BlockSpec((d_pad, h1p), lambda i: (0, 0)),      # W1: resident
            pl.BlockSpec((1, h1p), lambda i: (0, 0)),          # b1
            pl.BlockSpec((h1p, h2p), lambda i: (0, 0)),        # W2
            pl.BlockSpec((1, h2p), lambda i: (0, 0)),          # b2
            pl.BlockSpec((h2p, outp), lambda i: (0, 0)),       # W3
            pl.BlockSpec((1, outp), lambda i: (0, 0)),         # b3
        ],
        out_specs=pl.BlockSpec((tile_b, outp), lambda i: (i, 0)),
        compiler_params=pltpu.CompilerParams(
            dimension_semantics=("parallel",),
        ),
    )(xp, w1, b1, w2, b2, w3, b3)

    return out[:B, :1]


def init_params(key, input_dim, h1=1000, h2=200, out=1):
    """Init mimicking torch.nn.Linear default U[-1/sqrt(fan_in), 1/sqrt(fan_in)].

    Weights are stored [in, out] (transposed vs PyTorch), zero-padded to
    128-multiples and cast to bfloat16; biases zero-padded and kept float32."""
    d_pad = _round_up(input_dim, 128)
    h1p = _round_up(h1, 128)    # 1024
    h2p = _round_up(h2, 128)    # 256
    outp = _round_up(out, 128)  # 128
    ks = jax.random.split(key, 6)

    def lin(kw, kb, fan_in, fan_out, fi_pad, fo_pad):
        bound = float(fan_in) ** -0.5
        W = jax.random.uniform(kw, (fan_in, fan_out), jnp.float32, -bound, bound)
        b = jax.random.uniform(kb, (1, fan_out), jnp.float32, -bound, bound)
        Wp = jnp.zeros((fi_pad, fo_pad), jnp.float32).at[:fan_in, :fan_out].set(W)
        bp = jnp.zeros((1, fo_pad), jnp.float32).at[:, :fan_out].set(b)
        return Wp.astype(jnp.bfloat16), bp

    W1, b1 = lin(ks[0], ks[1], input_dim, h1, d_pad, h1p)
    W2, b2 = lin(ks[2], ks[3], h1, h2, h1p, h2p)
    W3, b3 = lin(ks[4], ks[5], h2, out, h2p, outp)
    return {"W1": W1, "b1": b1, "W2": W2, "b2": b2, "W3": W3, "b3": b3}


def _reference_forward(x, p):
    """Pure-JAX reference at the same (bf16 weight / f32 accumulate) precision."""
    B, D = x.shape
    d_pad = p["W1"].shape[0]
    xp = jnp.zeros((B, d_pad), jnp.bfloat16).at[:, :D].set(x.astype(jnp.bfloat16))
    h1 = jnp.maximum(
        jnp.dot(xp, p["W1"], preferred_element_type=jnp.float32) + p["b1"], 0.0
    ).astype(jnp.bfloat16)
    h2 = jnp.maximum(
        jnp.dot(h1, p["W2"], preferred_element_type=jnp.float32) + p["b2"], 0.0
    ).astype(jnp.bfloat16)
    z = jnp.dot(h2, p["W3"], preferred_element_type=jnp.float32) + p["b3"]
    return jax.nn.sigmoid(z)[:, :1]


if __name__ == "__main__":
    key = jax.random.PRNGKey(0)
    k_param, k_x = jax.random.split(key)

    B, D = 2, 32  # small batch, input_dim=32
    params = init_params(k_param, D)
    x = jax.random.normal(k_x, (B, D), jnp.float32)

    out = binary_classifier_forward(x, params)
    out = jax.block_until_ready(out)

    ref = _reference_forward(x, params)
    assert out.shape == (B, 1), out.shape
    assert jnp.all(jnp.isfinite(out)), out
    assert jnp.allclose(out, ref, atol=5e-3, rtol=5e-3), (out, ref)

    print("KERNEL_OK")
</pallas_src>

<mosaic_0001>
module attributes {stable_mosaic.version = 11 : i64} {
  func.func @_mlp_kernel(%arg0: i32, %arg1: memref<16x128xbf16, #tpu.memory_space<vmem>>, %arg2: memref<128x1024xbf16, #tpu.memory_space<vmem>>, %arg3: memref<1x1024xf32, #tpu.memory_space<vmem>>, %arg4: memref<1024x256xbf16, #tpu.memory_space<vmem>>, %arg5: memref<1x256xf32, #tpu.memory_space<vmem>>, %arg6: memref<256x128xbf16, #tpu.memory_space<vmem>>, %arg7: memref<1x128xf32, #tpu.memory_space<vmem>>, %arg8: memref<16x128xf32, #tpu.memory_space<vmem>>) attributes {dimension_semantics = [#tpu.dimension_semantics<parallel>], iteration_bounds = array<i64: 1>, scalar_prefetch = 0 : i64, scratch_operands = 0 : i64, tpu.core_type = #tpu.core_type<tc>, window_params = [{transform_indices = @transform_0, window_bounds = array<i64: 16, 128>}, {pipeline_mode = #tpu.pipeline_mode<synchronous>, transform_indices = @transform_1, window_bounds = array<i64: 128, 1024>}, {pipeline_mode = #tpu.pipeline_mode<synchronous>, transform_indices = @transform_2, window_bounds = array<i64: 1, 1024>}, {pipeline_mode = #tpu.pipeline_mode<synchronous>, transform_indices = @transform_3, window_bounds = array<i64: 1024, 256>}, {pipeline_mode = #tpu.pipeline_mode<synchronous>, transform_indices = @transform_4, window_bounds = array<i64: 1, 256>}, {pipeline_mode = #tpu.pipeline_mode<synchronous>, transform_indices = @transform_5, window_bounds = array<i64: 256, 128>}, {pipeline_mode = #tpu.pipeline_mode<synchronous>, transform_indices = @transform_6, window_bounds = array<i64: 1, 128>}, {transform_indices = @transform_7, window_bounds = array<i64: 16, 128>}]} {
    %c0 = arith.constant 0 : index
    %c0_0 = arith.constant 0 : index
    %0 = vector.load %arg1[%c0, %c0_0] : memref<16x128xbf16, #tpu.memory_space<vmem>>, vector<16x128xbf16>
    %c0_1 = arith.constant 0 : index
    %c0_2 = arith.constant 0 : index
    %1 = vector.load %arg2[%c0_1, %c0_2] : memref<128x1024xbf16, #tpu.memory_space<vmem>>, vector<128x1024xbf16>
    %cst = arith.constant dense<0.000000e+00> : vector<16x1024xf32>
    %2 = tpu.matmul %0, %1, %cst {dimension_numbers = #tpu.dot_dimension_numbers<[1], [0], [0], [1], [0, 0, 1, 1], [], []>} : vector<16x128xbf16>, vector<128x1024xbf16>, vector<16x1024xf32> -> vector<16x1024xf32>
    %c0_3 = arith.constant 0 : index
    %c0_4 = arith.constant 0 : index
    %3 = vector.load %arg3[%c0_3, %c0_4] : memref<1x1024xf32, #tpu.memory_space<vmem>>, vector<1x1024xf32>
    %4 = vector.broadcast %3 : vector<1x1024xf32> to vector<16x1024xf32>
    %5 = arith.addf %2, %4 : vector<16x1024xf32>
    %cst_5 = arith.constant 0.000000e+00 : f32
    %6 = vector.broadcast %cst_5 : f32 to vector<16x1024xf32>
    %7 = arith.maximumf %5, %6 : vector<16x1024xf32>
    %8 = arith.truncf %7 : vector<16x1024xf32> to vector<16x1024xbf16>
    %c0_6 = arith.constant 0 : index
    %c0_7 = arith.constant 0 : index
    %9 = vector.load %arg4[%c0_6, %c0_7] : memref<1024x256xbf16, #tpu.memory_space<vmem>>, vector<1024x256xbf16>
    %cst_8 = arith.constant dense<0.000000e+00> : vector<16x256xf32>
    %10 = tpu.matmul %8, %9, %cst_8 {dimension_numbers = #tpu.dot_dimension_numbers<[1], [0], [0], [1], [0, 0, 1, 1], [], []>} : vector<16x1024xbf16>, vector<1024x256xbf16>, vector<16x256xf32> -> vector<16x256xf32>
    %c0_9 = arith.constant 0 : index
    %c0_10 = arith.constant 0 : index
    %11 = vector.load %arg5[%c0_9, %c0_10] : memref<1x256xf32, #tpu.memory_space<vmem>>, vector<1x256xf32>
    %12 = vector.broadcast %11 : vector<1x256xf32> to vector<16x256xf32>
    %13 = arith.addf %10, %12 : vector<16x256xf32>
    %cst_11 = arith.constant 0.000000e+00 : f32
    %14 = vector.broadcast %cst_11 : f32 to vector<16x256xf32>
    %15 = arith.maximumf %13, %14 : vector<16x256xf32>
    %16 = arith.truncf %15 : vector<16x256xf32> to vector<16x256xbf16>
    %c0_12 = arith.constant 0 : index
    %c0_13 = arith.constant 0 : index
    %17 = vector.load %arg6[%c0_12, %c0_13] : memref<256x128xbf16, #tpu.memory_space<vmem>>, vector<256x128xbf16>
    %cst_14 = arith.constant dense<0.000000e+00> : vector<16x128xf32>
    %18 = tpu.matmul %16, %17, %cst_14 {dimension_numbers = #tpu.dot_dimension_numbers<[1], [0], [0], [1], [0, 0, 1, 1], [], []>} : vector<16x256xbf16>, vector<256x128xbf16>, vector<16x128xf32> -> vector<16x128xf32>
    %c0_15 = arith.constant 0 : index
    %c0_16 = arith.constant 0 : index
    %19 = vector.load %arg7[%c0_15, %c0_16] : memref<1x128xf32, #tpu.memory_space<vmem>>, vector<1x128xf32>
    %20 = vector.broadcast %19 : vector<1x128xf32> to vector<16x128xf32>
    %21 = arith.addf %18, %20 : vector<16x128xf32>
    %cst_17 = arith.constant 0.000000e+00 : f32
    %22 = vector.broadcast %cst_17 : f32 to vector<16x128xf32>
    %23 = arith.subf %22, %21 : vector<16x128xf32>
    %24 = math.exp %23 : vector<16x128xf32>
    %cst_18 = arith.constant 1.000000e+00 : f32
    %25 = vector.broadcast %cst_18 : f32 to vector<16x128xf32>
    %26 = arith.addf %25, %24 : vector<16x128xf32>
    %27 = tpu.reciprocal %26 {approx = true} : vector<16x128xf32> -> vector<16x128xf32>
    %c0_19 = arith.constant 0 : index
    %c0_20 = arith.constant 0 : index
    %28 = vector.load %arg8[%c0_19, %c0_20] : memref<16x128xf32, #tpu.memory_space<vmem>>, vector<16x128xf32>
    tpu.vector_store %arg8[%c0_19, %c0_20], %27 {strides = array<i32>} : memref<16x128xf32, #tpu.memory_space<vmem>>, vector<16x128xf32>,
    return
  }
  func.func @transform_0(%arg0: i32) -> (i32, i32) {
    %c0_i32 = arith.constant 0 : i32
    %c0_i32_0 = arith.constant 0 : i32
    return %arg0, %c0_i32 : i32, i32
  }
  func.func @transform_1(%arg0: i32) -> (i32, i32) {
    %c0_i32 = arith.constant 0 : i32
    %c0_i32_0 = arith.constant 0 : i32
    %c0_i32_1 = arith.constant 0 : i32
    return %c0_i32, %c0_i32_0 : i32, i32
  }
  func.func @transform_2(%arg0: i32) -> (i32, i32) {
    %c0_i32 = arith.constant 0 : i32
    %c0_i32_0 = arith.constant 0 : i32
    %c0_i32_1 = arith.constant 0 : i32
    return %c0_i32, %c0_i32_0 : i32, i32
  }
  func.func @transform_3(%arg0: i32) -> (i32, i32) {
    %c0_i32 = arith.constant 0 : i32
    %c0_i32_0 = arith.constant 0 : i32
    %c0_i32_1 = arith.constant 0 : i32
    return %c0_i32, %c0_i32_0 : i32, i32
  }
  func.func @transform_4(%arg0: i32) -> (i32, i32) {
    %c0_i32 = arith.constant 0 : i32
    %c0_i32_0 = arith.constant 0 : i32
    %c0_i32_1 = arith.constant 0 : i32
    return %c0_i32, %c0_i32_0 : i32, i32
  }
  func.func @transform_5(%arg0: i32) -> (i32, i32) {
    %c0_i32 = arith.constant 0 : i32
    %c0_i32_0 = arith.constant 0 : i32
    %c0_i32_1 = arith.constant 0 : i32
    return %c0_i32, %c0_i32_0 : i32, i32
  }
  func.func @transform_6(%arg0: i32) -> (i32, i32) {
    %c0_i32 = arith.constant 0 : i32
    %c0_i32_0 = arith.constant 0 : i32
    %c0_i32_1 = arith.constant 0 : i32
    return %c0_i32, %c0_i32_0 : i32, i32
  }
  func.func @transform_7(%arg0: i32) -> (i32, i32) {
    %c0_i32 = arith.constant 0 : i32
    %c0_i32_0 = arith.constant 0 : i32
    return %arg0, %c0_i32 : i32, i32
  }
}

</mosaic_0001>

<llo_original>
// kernel: tpu_custom_call.1
$region0: #{tpu_custom_call.1}
  #allocation0 [shape = 'u32[]', space=smem, size = 0x4, offset = 0x4, fixed_abs, tag = 'smem constant byte address 0x4 - core index']
  #allocation1 [shape = 'u32[144,128]{1,0:T(1,128)}', space=vmem, size = 0x12000, scoped, tag = 'internal scratch']
  %s0 = inlined_call_operand.hbm [shape: bf16[16,128], index: 0, kind: input, shape index: {}]
  %s1 = inlined_call_operand.hbm [shape: bf16[128,1024], index: 1, kind: input, shape index: {}]
  %s2 = inlined_call_operand.hbm [shape: f32[1,1024], index: 2, kind: input, shape index: {}]
  %s3 = inlined_call_operand.hbm [shape: bf16[1024,256], index: 3, kind: input, shape index: {}]
  %s4 = inlined_call_operand.vmem [shape: f32[1,256], index: 4, kind: input, shape index: {}]
  %s5 = inlined_call_operand.hbm [shape: bf16[256,128], index: 5, kind: input, shape index: {}]
  %s6 = inlined_call_operand.vmem [shape: f32[1,128], index: 6, kind: input, shape index: {}]
  %s7 = inlined_call_operand.hbm [shape: f32[16,128], index: 7, kind: output, shape index: {}]
  %s8 = sld [smem:[#allocation0]]
  $region58: #{tpu_custom_call.1} parent=0
    _
  %s10 = ssub.s32 1, %s8
  %s11 = scalar_select 0, %s10, %s8
  $region1: #{tpu_custom_call.1} parent=0
    #allocation2 [shape = 'u8[4096]{0}', space=vmem, size = 0x1000, scoped, tag = 'input window, operand 0, single buffered']
    #allocation3 [shape = 's32[1]{0}', space=sflag, size = 0x4, scoped, tag = 'scoped memory for tpu_custom_call.1']
    #allocation4 [shape = 's32[1]{0}', space=sflag, size = 0x4, scoped, tag = 'scoped memory for tpu_custom_call.1']
    #allocation5 [shape = 'u8[262144]{0}', space=vmem, size = 0x40000, scoped, tag = 'input window, operand 1, single buffered']
    #allocation6 [shape = 's32[1]{0}', space=sflag, size = 0x4, scoped, tag = 'scoped memory for tpu_custom_call.1']
    #allocation7 [shape = 'u8[4096]{0}', space=vmem, size = 0x1000, scoped, tag = 'input window, operand 2, single buffered']
    #allocation8 [shape = 'u8[524288]{0}', space=vmem, size = 0x80000, scoped, tag = 'input window, operand 3, single buffered']
    #allocation9 [shape = 's32[1]{0}', space=sflag, size = 0x4, scoped, tag = 'scoped memory for tpu_custom_call.1']
    #allocation10 [shape = 'u8[65536]{0}', space=vmem, size = 0x10000, scoped, tag = 'input window, operand 5, single buffered']
    #allocation11 [shape = 'u8[8192]{0}', space=vmem, size = 0x2000, scoped, tag = 'output window, operand 0, single buffered']
    %12 = vsyncpa [#allocation3], 0
    %13 = vsyncpa [#allocation6], 0
    %14 = vsyncpa [#allocation9], 0
    %15 = vsyncpa [#allocation4], 0
    // Predicated region
    $region2: #{tpu_custom_call.1} parent=1 // pred_check
      _
    $region3: #{tpu_custom_call.1} parent=1 // pred_check_branch
      %17 = sbr.rel (0) target = $region5
    $region4: #{tpu_custom_call.1} parent=1 // pred_region
      %s19 = ssub.s32 128, 128
      %20 = vsyncadd [#allocation3], %s19
      %s21 = sshll.u32 [#allocation2], 4
      %s22 = int_to_ptr.vmem [resolvable:$true] %s21
      %27 = dma.hbm_to_vmem [thread:$0]  %s0, 128, %s22, [#allocation3], 64, 64, 4
    $region5: #{tpu_custom_call.1} parent=1 // pred_fallthru
      _
    // Predicated region
    $region6: #{tpu_custom_call.1} parent=1 // pred_check
      _
    $region7: #{tpu_custom_call.1} parent=1 // pred_check_branch
      %29 = sbr.rel (0) target = $region9
    $region8: #{tpu_custom_call.1} parent=1 // pred_region
      %s31 = ssub.s32 8192, 8192
      %32 = vsyncadd [#allocation6], %s31
      %s33 = sshll.u32 [#allocation5], 4
      %s34 = int_to_ptr.vmem [resolvable:$true] %s33
      %39 = dma.hbm_to_vmem [thread:$0]  %s1, 8192, %s34, [#allocation6], 512, 512, 32
    $region9: #{tpu_custom_call.1} parent=1 // pred_fallthru
      _
    // Predicated region
    $region10: #{tpu_custom_call.1} parent=1 // pred_check
      _
    $region11: #{tpu_custom_call.1} parent=1 // pred_check_branch
      %41 = sbr.rel (0) target = $region13
    $region12: #{tpu_custom_call.1} parent=1 // pred_region
      %s43 = ssub.s32 128, 128
      %44 = vsyncadd [#allocation6], %s43
      %s46 = sshll.u32 [#allocation7], 4
      %s47 = int_to_ptr.vmem [resolvable:$true] %s46
      %49 = dma.hbm_to_vmem [thread:$0]  %s2, 128, %s47, [#allocation6]
    $region13: #{tpu_custom_call.1} parent=1 // pred_fallthru
      _
    // Predicated region
    $region14: #{tpu_custom_call.1} parent=1 // pred_check
      _
    $region15: #{tpu_custom_call.1} parent=1 // pred_check_branch
      %51 = sbr.rel (0) target = $region17
    $region16: #{tpu_custom_call.1} parent=1 // pred_region
      %s53 = ssub.s32 16384, 16384
      %54 = vsyncadd [#allocation9], %s53
      %s55 = sshll.u32 [#allocation8], 4
      %s56 = int_to_ptr.vmem [resolvable:$true] %s55
      %61 = dma.hbm_to_vmem [thread:$0]  %s3, 16384, %s56, [#allocation9], 128, 128, 8
    $region17: #{tpu_custom_call.1} parent=1 // pred_fallthru
      _
    // Predicated region
    $region18: #{tpu_custom_call.1} parent=1 // pred_check
      _
    $region19: #{tpu_custom_call.1} parent=1 // pred_check_branch
      %63 = sbr.rel (0) target = $region21
    $region20: #{tpu_custom_call.1} parent=1 // pred_region
      _
    $region21: #{tpu_custom_call.1} parent=1 // pred_fallthru
      _
    // Predicated region
    $region22: #{tpu_custom_call.1} parent=1 // pred_check
      _
    $region23: #{tpu_custom_call.1} parent=1 // pred_check_branch
      %65 = sbr.rel (0) target = $region25
    $region24: #{tpu_custom_call.1} parent=1 // pred_region
      %s67 = ssub.s32 2048, 2048
      %68 = vsyncadd [#allocation9], %s67
      %s69 = sshll.u32 [#allocation10], 4
      %s70 = int_to_ptr.vmem [resolvable:$true] %s69
      %75 = dma.hbm_to_vmem [thread:$0]  %s5, 2048, %s70, [#allocation9], 64, 64, 4
    $region25: #{tpu_custom_call.1} parent=1 // pred_fallthru
      _
    // Predicated region
    $region26: #{tpu_custom_call.1} parent=1 // pred_check
      _
    $region27: #{tpu_custom_call.1} parent=1 // pred_check_branch
      %77 = sbr.rel (0) target = $region29
    $region28: #{tpu_custom_call.1} parent=1 // pred_region
      _
    $region29: #{tpu_custom_call.1} parent=1 // pred_fallthru
      _
    // Predicated region
    $region30: #{tpu_custom_call.1} parent=1 // pred_check
      _
    $region31: #{tpu_custom_call.1} parent=1 // pred_check_branch
      %79 = sbr.rel (0) target = $region33
    $region32: #{tpu_custom_call.1} parent=1 // pred_region
      %80 = dma.done [#allocation3], 128
    $region33: #{tpu_custom_call.1} parent=1 // pred_fallthru
      _
    // Predicated region
    $region34: #{tpu_custom_call.1} parent=1 // pred_check
      _
    $region35: #{tpu_custom_call.1} parent=1 // pred_check_branch
      %82 = sbr.rel (0) target = $region37
    $region36: #{tpu_custom_call.1} parent=1 // pred_region
      %83 = dma.done [#allocation6], 8192
    $region37: #{tpu_custom_call.1} parent=1 // pred_fallthru
      _
    // Predicated region
    $region38: #{tpu_custom_call.1} parent=1 // pred_check
      _
    $region39: #{tpu_custom_call.1} parent=1 // pred_check_branch
      %85 = sbr.rel (0) target = $region41
    $region40: #{tpu_custom_call.1} parent=1 // pred_region
      %86 = dma.done [#allocation6], 128
    $region41: #{tpu_custom_call.1} parent=1 // pred_fallthru
      _
    // Predicated region
    $region42: #{tpu_custom_call.1} parent=1 // pred_check
      _
    $region43: #{tpu_custom_call.1} parent=1 // pred_check_branch
      %88 = sbr.rel (0) target = $region45
    $region44: #{tpu_custom_call.1} parent=1 // pred_region
      %89 = dma.done [#allocation9], 16384
    $region45: #{tpu_custom_call.1} parent=1 // pred_fallthru
      _
    // Predicated region
    $region46: #{tpu_custom_call.1} parent=1 // pred_check
      _
    $region47: #{tpu_custom_call.1} parent=1 // pred_check_branch
      %91 = sbr.rel (0) target = $region49
    $region48: #{tpu_custom_call.1} parent=1 // pred_region
      %92 = dma.done [#allocation9], 2048
    $region49: #{tpu_custom_call.1} parent=1 // pred_fallthru
      _
    %v94 = vld [vmem:[#allocation2] sm:$0xf]
    %v95 = vld [vmem:[#allocation2 + $0x4] sm:$0xf]
    %v96 = vld [vmem:[#allocation5] sm:$0xff]
    %v97 = vld [vmem:[#allocation5 + $0x8] sm:$0xff]
    %v98 = vld [vmem:[#allocation5 + $0x10] sm:$0xff]
    %v99 = vld [vmem:[#allocation5 + $0x18] sm:$0xff]
    %v100 = vld [vmem:[#allocation5 + $0x20] sm:$0xff]
    %v101 = vld [vmem:[#allocation5 + $0x28] sm:$0xff]
    %v102 = vld [vmem:[#allocation5 + $0x30] sm:$0xff]
    %v103 = vld [vmem:[#allocation5 + $0x38] sm:$0xff]
    %v104 = vld [vmem:[#allocation5 + $0x40] sm:$0xff]
    %v105 = vld [vmem:[#allocation5 + $0x48] sm:$0xff]
    %v106 = vld [vmem:[#allocation5 + $0x50] sm:$0xff]
    %v107 = vld [vmem:[#allocation5 + $0x58] sm:$0xff]
    %v108 = vld [vmem:[#allocation5 + $0x60] sm:$0xff]
    %v109 = vld [vmem:[#allocation5 + $0x68] sm:$0xff]
    %v110 = vld [vmem:[#allocation5 + $0x70] sm:$0xff]
    %v111 = vld [vmem:[#allocation5 + $0x78] sm:$0xff]
    %v112 = vld [vmem:[#allocation5 + $0x80] sm:$0xff]
    %v113 = vld [vmem:[#allocation5 + $0x88] sm:$0xff]
    %v114 = vld [vmem:[#allocation5 + $0x90] sm:$0xff]
    %v115 = vld [vmem:[#allocation5 + $0x98] sm:$0xff]
    %v116 = vld [vmem:[#allocation5 + $0xa0] sm:$0xff]
    %v117 = vld [vmem:[#allocation5 + $0xa8] sm:$0xff]
    %v118 = vld [vmem:[#allocation5 + $0xb0] sm:$0xff]
    %v119 = vld [vmem:[#allocation5 + $0xb8] sm:$0xff]
    %v120 = vld [vmem:[#allocation5 + $0xc0] sm:$0xff]
    %v121 = vld [vmem:[#allocation5 + $0xc8] sm:$0xff]
    %v122 = vld [vmem:[#allocation5 + $0xd0] sm:$0xff]
    %v123 = vld [vmem:[#allocation5 + $0xd8] sm:$0xff]
    %v124 = vld [vmem:[#allocation5 + $0xe0] sm:$0xff]
    %v125 = vld [vmem:[#allocation5 + $0xe8] sm:$0xff]
    %v126 = vld [vmem:[#allocation5 + $0xf0] sm:$0xff]
    %v127 = vld [vmem:[#allocation5 + $0xf8] sm:$0xff]
    %v128 = vld [vmem:[#allocation5 + $0x100] sm:$0xff]
    %v129 = vld [vmem:[#allocation5 + $0x108] sm:$0xff]
    %v130 = vld [vmem:[#allocation5 + $0x110] sm:$0xff]
    %v131 = vld [vmem:[#allocation5 + $0x118] sm:$0xff]
    %v132 = vld [vmem:[#allocation5 + $0x120] sm:$0xff]
    %v133 = vld [vmem:[#allocation5 + $0x128] sm:$0xff]
    %v134 = vld [vmem:[#allocation5 + $0x130] sm:$0xff]
    %v135 = vld [vmem:[#allocation5 + $0x138] sm:$0xff]
    %v136 = vld [vmem:[#allocation5 + $0x140] sm:$0xff]
    %v137 = vld [vmem:[#allocation5 + $0x148] sm:$0xff]
    %v138 = vld [vmem:[#allocation5 + $0x150] sm:$0xff]
    %v139 = vld [vmem:[#allocation5 + $0x158] sm:$0xff]
    %v140 = vld [vmem:[#allocation5 + $0x160] sm:$0xff]
    %v141 = vld [vmem:[#allocation5 + $0x168] sm:$0xff]
    %v142 = vld [vmem:[#allocation5 + $0x170] sm:$0xff]
    %v143 = vld [vmem:[#allocation5 + $0x178] sm:$0xff]
    %v144 = vld [vmem:[#allocation5 + $0x180] sm:$0xff]
    %v145 = vld [vmem:[#allocation5 + $0x188] sm:$0xff]
    %v146 = vld [vmem:[#allocation5 + $0x190] sm:$0xff]
    %v147 = vld [vmem:[#allocation5 + $0x198] sm:$0xff]
    %v148 = vld [vmem:[#allocation5 + $0x1a0] sm:$0xff]
    %v149 = vld [vmem:[#allocation5 + $0x1a8] sm:$0xff]
    %v150 = vld [vmem:[#allocation5 + $0x1b0] sm:$0xff]
    %v151 = vld [vmem:[#allocation5 + $0x1b8] sm:$0xff]
    %v152 = vld [vmem:[#allocation5 + $0x1c0] sm:$0xff]
    %v153 = vld [vmem:[#allocation5 + $0x1c8] sm:$0xff]
    %v154 = vld [vmem:[#allocation5 + $0x1d0] sm:$0xff]
    %v155 = vld [vmem:[#allocation5 + $0x1d8] sm:$0xff]
    %v156 = vld [vmem:[#allocation5 + $0x1e0] sm:$0xff]
    %v157 = vld [vmem:[#allocation5 + $0x1e8] sm:$0xff]
    %v158 = vld [vmem:[#allocation5 + $0x1f0] sm:$0xff]
    %v159 = vld [vmem:[#allocation5 + $0x1f8] sm:$0xff]
    %v160 = vld [vmem:[#allocation7] sm:$0xff]
    %v162 = vlaneseq
    %v163 = vshrl.u32 %v162, 7
    %v164 = vsub.s32 0, %v163
    %v165 = vrot.slane %v160, %v164
    %v166 = vlaneseq
    %v167 = vshrl.u32 %v166, 7
    %v168 = vsub.s32 1, %v167
    %v169 = vrot.slane %v160, %v168
    %v170 = vlaneseq
    %v171 = vshrl.u32 %v170, 7
    %v172 = vsub.s32 2, %v171
    %v173 = vrot.slane %v160, %v172
    %v174 = vlaneseq
    %v175 = vshrl.u32 %v174, 7
    %v176 = vsub.s32 3, %v175
    %v177 = vrot.slane %v160, %v176
    %v178 = vlaneseq
    %v179 = vshrl.u32 %v178, 7
    %v180 = vsub.s32 4, %v179
    %v181 = vrot.slane %v160, %v180
    %v182 = vlaneseq
    %v183 = vshrl.u32 %v182, 7
    %v184 = vsub.s32 5, %v183
    %v185 = vrot.slane %v160, %v184
    %v186 = vlaneseq
    %v187 = vshrl.u32 %v186, 7
    %v188 = vsub.s32 6, %v187
    %v189 = vrot.slane %v160, %v188
    %v190 = vlaneseq
    %v191 = vshrl.u32 %v190, 7
    %v192 = vsub.s32 7, %v191
    %v193 = vrot.slane %v160, %v192
    %v204 = vunpack.c.l.b16 %v94
    %v205 = vunpack.c.l.b16 %v95
    %v206 = vpack.c.b16 %v205, %v204
    %v272 = vunpack.c.l.b16 %v96
    %v273 = vunpack.c.h.b16 %v96
    %v274 = vunpack.c.l.b16 %v97
    %v275 = vunpack.c.h.b16 %v97
    %v276 = vunpack.c.l.b16 %v98
    %v277 = vunpack.c.h.b16 %v98
    %v278 = vunpack.c.l.b16 %v99
    %v279 = vunpack.c.h.b16 %v99
    %v280 = vunpack.c.l.b16 %v100
    %v281 = vunpack.c.h.b16 %v100
    %v282 = vunpack.c.l.b16 %v101
    %v283 = vunpack.c.h.b16 %v101
    %v284 = vunpack.c.l.b16 %v102
    %v285 = vunpack.c.h.b16 %v102
    %v286 = vunpack.c.l.b16 %v103
    %v287 = vunpack.c.h.b16 %v103
    %v288 = vunpack.c.l.b16 %v104
    %v289 = vunpack.c.h.b16 %v104
    %v290 = vunpack.c.l.b16 %v105
    %v291 = vunpack.c.h.b16 %v105
    %v292 = vunpack.c.l.b16 %v106
    %v293 = vunpack.c.h.b16 %v106
    %v294 = vunpack.c.l.b16 %v107
    %v295 = vunpack.c.h.b16 %v107
    %v296 = vunpack.c.l.b16 %v108
    %v297 = vunpack.c.h.b16 %v108
    %v298 = vunpack.c.l.b16 %v109
    %v299 = vunpack.c.h.b16 %v109
    %v300 = vunpack.c.l.b16 %v110
    %v301 = vunpack.c.h.b16 %v110
    %v302 = vunpack.c.l.b16 %v111
    %v303 = vunpack.c.h.b16 %v111
    %v304 = vunpack.c.l.b16 %v112
    %v305 = vunpack.c.h.b16 %v112
    %v306 = vunpack.c.l.b16 %v113
    %v307 = vunpack.c.h.b16 %v113
    %v308 = vunpack.c.l.b16 %v114
    %v309 = vunpack.c.h.b16 %v114
    %v310 = vunpack.c.l.b16 %v115
    %v311 = vunpack.c.h.b16 %v115
    %v312 = vunpack.c.l.b16 %v116
    %v313 = vunpack.c.h.b16 %v116
    %v314 = vunpack.c.l.b16 %v117
    %v315 = vunpack.c.h.b16 %v117
    %v316 = vunpack.c.l.b16 %v118
    %v317 = vunpack.c.h.b16 %v118
    %v318 = vunpack.c.l.b16 %v119
    %v319 = vunpack.c.h.b16 %v119
    %v320 = vunpack.c.l.b16 %v120
    %v321 = vunpack.c.h.b16 %v120
    %v322 = vunpack.c.l.b16 %v121
    %v323 = vunpack.c.h.b16 %v121
    %v324 = vunpack.c.l.b16 %v122
    %v325 = vunpack.c.h.b16 %v122
    %v326 = vunpack.c.l.b16 %v123
    %v327 = vunpack.c.h.b16 %v123
    %v328 = vunpack.c.l.b16 %v124
    %v329 = vunpack.c.h.b16 %v124
    %v330 = vunpack.c.l.b16 %v125
    %v331 = vunpack.c.h.b16 %v125
    %v332 = vunpack.c.l.b16 %v126
    %v333 = vunpack.c.h.b16 %v126
    %v334 = vunpack.c.l.b16 %v127
    %v335 = vunpack.c.h.b16 %v127
    %v336 = vunpack.c.l.b16 %v128
    %v337 = vunpack.c.h.b16 %v128
    %v338 = vunpack.c.l.b16 %v129
    %v339 = vunpack.c.h.b16 %v129
    %v340 = vunpack.c.l.b16 %v130
    %v341 = vunpack.c.h.b16 %v130
    %v342 = vunpack.c.l.b16 %v131
    %v343 = vunpack.c.h.b16 %v131
    %v344 = vunpack.c.l.b16 %v132
    %v345 = vunpack.c.h.b16 %v132
    %v346 = vunpack.c.l.b16 %v133
    %v347 = vunpack.c.h.b16 %v133
    %v348 = vunpack.c.l.b16 %v134
    %v349 = vunpack.c.h.b16 %v134
    %v350 = vunpack.c.l.b16 %v135
    %v351 = vunpack.c.h.b16 %v135
    %v352 = vunpack.c.l.b16 %v136
    %v353 = vunpack.c.h.b16 %v136
    %v354 = vunpack.c.l.b16 %v137
    %v355 = vunpack.c.h.b16 %v137
    %v356 = vunpack.c.l.b16 %v138
    %v357 = vunpack.c.h.b16 %v138
    %v358 = vunpack.c.l.b16 %v139
    %v359 = vunpack.c.h.b16 %v139
    %v360 = vunpack.c.l.b16 %v140
    %v361 = vunpack.c.h.b16 %v140
    %v362 = vunpack.c.l.b16 %v141
    %v363 = vunpack.c.h.b16 %v141
    %v364 = vunpack.c.l.b16 %v142
    %v365 = vunpack.c.h.b16 %v142
    %v366 = vunpack.c.l.b16 %v143
    %v367 = vunpack.c.h.b16 %v143
    %v368 = vunpack.c.l.b16 %v144
    %v369 = vunpack.c.h.b16 %v144
    %v370 = vunpack.c.l.b16 %v145
    %v371 = vunpack.c.h.b16 %v145
    %v372 = vunpack.c.l.b16 %v146
    %v373 = vunpack.c.h.b16 %v146
    %v374 = vunpack.c.l.b16 %v147
    %v375 = vunpack.c.h.b16 %v147
    %v376 = vunpack.c.l.b16 %v148
    %v377 = vunpack.c.h.b16 %v148
    %v378 = vunpack.c.l.b16 %v149
    %v379 = vunpack.c.h.b16 %v149
    %v380 = vunpack.c.l.b16 %v150
    %v381 = vunpack.c.h.b16 %v150
    %v382 = vunpack.c.l.b16 %v151
    %v383 = vunpack.c.h.b16 %v151
    %v384 = vunpack.c.l.b16 %v152
    %v385 = vunpack.c.h.b16 %v152
    %v386 = vunpack.c.l.b16 %v153
    %v387 = vunpack.c.h.b16 %v153
    %v388 = vunpack.c.l.b16 %v154
    %v389 = vunpack.c.h.b16 %v154
    %v390 = vunpack.c.l.b16 %v155
    %v391 = vunpack.c.h.b16 %v155
    %v392 = vunpack.c.l.b16 %v156
    %v393 = vunpack.c.h.b16 %v156
    %v394 = vunpack.c.l.b16 %v157
    %v395 = vunpack.c.h.b16 %v157
    %v396 = vunpack.c.l.b16 %v158
    %v397 = vunpack.c.h.b16 %v158
    %v398 = vunpack.c.l.b16 %v159
    %v399 = vunpack.c.h.b16 %v159
    %v400 = vpack.c.b16 %v280, %v272
    %v401 = vpack.c.b16 %v281, %v273
    %v402 = vpack.c.b16 %v282, %v274
    %v403 = vpack.c.b16 %v283, %v275
    %v404 = vpack.c.b16 %v284, %v276
    %v405 = vpack.c.b16 %v285, %v277
    %v406 = vpack.c.b16 %v286, %v278
    %v407 = vpack.c.b16 %v287, %v279
    %v408 = vpack.c.b16 %v296, %v288
    %v409 = vpack.c.b16 %v297, %v289
    %v410 = vpack.c.b16 %v298, %v290
    %v411 = vpack.c.b16 %v299, %v291
    %v412 = vpack.c.b16 %v300, %v292
    %v413 = vpack.c.b16 %v301, %v293
    %v414 = vpack.c.b16 %v302, %v294
    %v415 = vpack.c.b16 %v303, %v295
    %v416 = vpack.c.b16 %v312, %v304
    %v417 = vpack.c.b16 %v313, %v305
    %v418 = vpack.c.b16 %v314, %v306
    %v419 = vpack.c.b16 %v315, %v307
    %v420 = vpack.c.b16 %v316, %v308
    %v421 = vpack.c.b16 %v317, %v309
    %v422 = vpack.c.b16 %v318, %v310
    %v423 = vpack.c.b16 %v319, %v311
    %v424 = vpack.c.b16 %v328, %v320
    %v425 = vpack.c.b16 %v329, %v321
    %v426 = vpack.c.b16 %v330, %v322
    %v427 = vpack.c.b16 %v331, %v323
    %v428 = vpack.c.b16 %v332, %v324
    %v429 = vpack.c.b16 %v333, %v325
    %v430 = vpack.c.b16 %v334, %v326
    %v431 = vpack.c.b16 %v335, %v327
    %v432 = vpack.c.b16 %v344, %v336
    %v433 = vpack.c.b16 %v345, %v337
    %v434 = vpack.c.b16 %v346, %v338
    %v435 = vpack.c.b16 %v347, %v339
    %v436 = vpack.c.b16 %v348, %v340
    %v437 = vpack.c.b16 %v349, %v341
    %v438 = vpack.c.b16 %v350, %v342
    %v439 = vpack.c.b16 %v351, %v343
    %v440 = vpack.c.b16 %v360, %v352
    %v441 = vpack.c.b16 %v361, %v353
    %v442 = vpack.c.b16 %v362, %v354
    %v443 = vpack.c.b16 %v363, %v355
    %v444 = vpack.c.b16 %v364, %v356
    %v445 = vpack.c.b16 %v365, %v357
    %v446 = vpack.c.b16 %v366, %v358
    %v447 = vpack.c.b16 %v367, %v359
    %v448 = vpack.c.b16 %v376, %v368
    %v449 = vpack.c.b16 %v377, %v369
    %v450 = vpack.c.b16 %v378, %v370
    %v451 = vpack.c.b16 %v379, %v371
    %v452 = vpack.c.b16 %v380, %v372
    %v453 = vpack.c.b16 %v381, %v373
    %v454 = vpack.c.b16 %v382, %v374
    %v455 = vpack.c.b16 %v383, %v375
    %v456 = vpack.c.b16 %v392, %v384
    %v457 = vpack.c.b16 %v393, %v385
    %v458 = vpack.c.b16 %v394, %v386
    %v459 = vpack.c.b16 %v395, %v387
    %v460 = vpack.c.b16 %v396, %v388
    %v461 = vpack.c.b16 %v397, %v389
    %v462 = vpack.c.b16 %v398, %v390
    %v463 = vpack.c.b16 %v399, %v391
    %528 = vmatprep.subr.bf16.mxu0 %v401
    %529 = vmatpush1.bf16.msra.mxu0 %v400
    %530 = vmatprep.subr.bf16.mxu0 %v409
    %531 = vmatpush1.bf16.msra.mxu0 %v408
    %532 = vmatprep.subr.bf16.mxu0 %v417
    %533 = vmatpush1.bf16.msra.mxu0 %v416
    %534 = vmatprep.subr.bf16.mxu0 %v425
    %535 = vmatpush1.bf16.msra.mxu0 %v424
    %536 = vmatprep.subr.bf16.mxu0 %v433
    %537 = vmatpush1.bf16.msra.mxu0 %v432
    %538 = vmatprep.subr.bf16.mxu0 %v441
    %539 = vmatpush1.bf16.msra.mxu0 %v440
    %540 = vmatprep.subr.bf16.mxu0 %v449
    %541 = vmatpush1.bf16.msra.mxu0 %v448
    %542 = vmatprep.subr.bf16.mxu0 %v457
    %543 = vmatpush1.bf16.msra.mxu0 %v456
    %544 = vmatprep.subr.bf16.mxu0 0
    %545 = vmatpush1.bf16.msra.mxu0 0
    %546 = vmatprep.subr.bf16.mxu0 0
    %547 = vmatpush1.bf16.msra.mxu0 0
    %548 = vmatprep.subr.bf16.mxu0 0
    %549 = vmatpush1.bf16.msra.mxu0 0
    %550 = vmatprep.subr.bf16.mxu0 0
    %551 = vmatpush1.bf16.msra.mxu0 0
    %552 = vmatprep.subr.bf16.mxu0 0
    %553 = vmatpush1.bf16.msra.mxu0 0
    %554 = vmatprep.subr.bf16.mxu0 0
    %555 = vmatpush1.bf16.msra.mxu0 0
    %556 = vmatprep.subr.bf16.mxu0 0
    %557 = vmatpush1.bf16.msra.mxu0 0
    %558 = vmatprep.subr.bf16.mxu0 0
    %559 = vmatpush1.bf16.msra.mxu0 0
    %560 = vmatprep.mubr.bf16.mxu0 0
    %561 = vmatmul.mubr.bf16.gmra.mrb[0].mxu0 %v206
    %v562 = vpop.f32.mrb[0].mxu0
    %v563 = vadd.f32 %v165, %v562
    %v564 = vpop.f32.mrb[0].mxu0
    %v565 = vadd.f32 %v169, %v564
    %v566 = vpop.f32.mrb[0].mxu0
    %v567 = vadd.f32 %v165, %v566
    %v568 = vpop.f32.mrb[0].mxu0
    %v569 = vadd.f32 %v169, %v568
    %570 = vdwg.mxu0
    %571 = vmatprep.subr.bf16.mxu0 %v403
    %572 = vmatpush1.bf16.msra.mxu0 %v402
    %573 = vmatprep.subr.bf16.mxu0 %v411
    %574 = vmatpush1.bf16.msra.mxu0 %v410
    %575 = vmatprep.subr.bf16.mxu0 %v419
    %576 = vmatpush1.bf16.msra.mxu0 %v418
    %577 = vmatprep.subr.bf16.mxu0 %v427
    %578 = vmatpush1.bf16.msra.mxu0 %v426
    %579 = vmatprep.subr.bf16.mxu0 %v435
    %580 = vmatpush1.bf16.msra.mxu0 %v434
    %581 = vmatprep.subr.bf16.mxu0 %v443
    %582 = vmatpush1.bf16.msra.mxu0 %v442
    %583 = vmatprep.subr.bf16.mxu0 %v451
    %584 = vmatpush1.bf16.msra.mxu0 %v450
    %585 = vmatprep.subr.bf16.mxu0 %v459
    %586 = vmatpush1.bf16.msra.mxu0 %v458
    %587 = vmatprep.subr.bf16.mxu0 0
    %588 = vmatpush1.bf16.msra.mxu0 0
    %589 = vmatprep.subr.bf16.mxu0 0
    %590 = vmatpush1.bf16.msra.mxu0 0
    %591 = vmatprep.subr.bf16.mxu0 0
    %592 = vmatpush1.bf16.msra.mxu0 0
    %593 = vmatprep.subr.bf16.mxu0 0
    %594 = vmatpush1.bf16.msra.mxu0 0
    %595 = vmatprep.subr.bf16.mxu0 0
    %596 = vmatpush1.bf16.msra.mxu0 0
    %597 = vmatprep.subr.bf16.mxu0 0
    %598 = vmatpush1.bf16.msra.mxu0 0
    %599 = vmatprep.subr.bf16.mxu0 0
    %600 = vmatpush1.bf16.msra.mxu0 0
    %601 = vmatprep.subr.bf16.mxu0 0
    %602 = vmatpush1.bf16.msra.mxu0 0
    %603 = vmatprep.mubr.bf16.mxu0 0
    %604 = vmatmul.mubr.bf16.gmra.mrb[0].mxu0 %v206
    %v605 = vpop.f32.mrb[0].mxu0
    %v606 = vadd.f32 %v173, %v605
    %v607 = vpop.f32.mrb[0].mxu0
    %v608 = vadd.f32 %v177, %v607
    %v609 = vpop.f32.mrb[0].mxu0
    %v610 = vadd.f32 %v173, %v609
    %v611 = vpop.f32.mrb[0].mxu0
    %v612 = vadd.f32 %v177, %v611
    %613 = vdwg.mxu0
    %614 = vmatprep.subr.bf16.mxu0 %v405
    %615 = vmatpush1.bf16.msra.mxu0 %v404
    %616 = vmatprep.subr.bf16.mxu0 %v413
    %617 = vmatpush1.bf16.msra.mxu0 %v412
    %618 = vmatprep.subr.bf16.mxu0 %v421
    %619 = vmatpush1.bf16.msra.mxu0 %v420
    %620 = vmatprep.subr.bf16.mxu0 %v429
    %621 = vmatpush1.bf16.msra.mxu0 %v428
    %622 = vmatprep.subr.bf16.mxu0 %v437
    %623 = vmatpush1.bf16.msra.mxu0 %v436
    %624 = vmatprep.subr.bf16.mxu0 %v445
    %625 = vmatpush1.bf16.msra.mxu0 %v444
    %626 = vmatprep.subr.bf16.mxu0 %v453
    %627 = vmatpush1.bf16.msra.mxu0 %v452
    %628 = vmatprep.subr.bf16.mxu0 %v461
    %629 = vmatpush1.bf16.msra.mxu0 %v460
    %630 = vmatprep.subr.bf16.mxu0 0
    %631 = vmatpush1.bf16.msra.mxu0 0
    %632 = vmatprep.subr.bf16.mxu0 0
    %633 = vmatpush1.bf16.msra.mxu0 0
    %634 = vmatprep.subr.bf16.mxu0 0
    %635 = vmatpush1.bf16.msra.mxu0 0
    %636 = vmatprep.subr.bf16.mxu0 0
    %637 = vmatpush1.bf16.msra.mxu0 0
    %638 = vmatprep.subr.bf16.mxu0 0
    %639 = vmatpush1.bf16.msra.mxu0 0
    %640 = vmatprep.subr.bf16.mxu0 0
    %641 = vmatpush1.bf16.msra.mxu0 0
    %642 = vmatprep.subr.bf16.mxu0 0
    %643 = vmatpush1.bf16.msra.mxu0 0
    %644 = vmatprep.subr.bf16.mxu0 0
    %645 = vmatpush1.bf16.msra.mxu0 0
    %646 = vmatprep.mubr.bf16.mxu0 0
    %647 = vmatmul.mubr.bf16.gmra.mrb[0].mxu0 %v206
    %v648 = vpop.f32.mrb[0].mxu0
    %v649 = vadd.f32 %v181, %v648
    %v650 = vpop.f32.mrb[0].mxu0
    %v651 = vadd.f32 %v185, %v650
    %v652 = vpop.f32.mrb[0].mxu0
    %v653 = vadd.f32 %v181, %v652
    %v654 = vpop.f32.mrb[0].mxu0
    %v655 = vadd.f32 %v185, %v654
    %656 = vdwg.mxu0
    %657 = vmatprep.subr.bf16.mxu0 %v407
    %658 = vmatpush1.bf16.msra.mxu0 %v406
    %659 = vmatprep.subr.bf16.mxu0 %v415
    %660 = vmatpush1.bf16.msra.mxu0 %v414
    %661 = vmatprep.subr.bf16.mxu0 %v423
    %662 = vmatpush1.bf16.msra.mxu0 %v422
    %663 = vmatprep.subr.bf16.mxu0 %v431
    %664 = vmatpush1.bf16.msra.mxu0 %v430
    %665 = vmatprep.subr.bf16.mxu0 %v439
    %666 = vmatpush1.bf16.msra.mxu0 %v438
    %667 = vmatprep.subr.bf16.mxu0 %v447
    %668 = vmatpush1.bf16.msra.mxu0 %v446
    %669 = vmatprep.subr.bf16.mxu0 %v455
    %670 = vmatpush1.bf16.msra.mxu0 %v454
    %671 = vmatprep.subr.bf16.mxu0 %v463
    %672 = vmatpush1.bf16.msra.mxu0 %v462
    %673 = vmatprep.subr.bf16.mxu0 0
    %674 = vmatpush1.bf16.msra.mxu0 0
    %675 = vmatprep.subr.bf16.mxu0 0
    %676 = vmatpush1.bf16.msra.mxu0 0
    %677 = vmatprep.subr.bf16.mxu0 0
    %678 = vmatpush1.bf16.msra.mxu0 0
    %679 = vmatprep.subr.bf16.mxu0 0
    %680 = vmatpush1.bf16.msra.mxu0 0
    %681 = vmatprep.subr.bf16.mxu0 0
    %682 = vmatpush1.bf16.msra.mxu0 0
    %683 = vmatprep.subr.bf16.mxu0 0
    %684 = vmatpush1.bf16.msra.mxu0 0
    %685 = vmatprep.subr.bf16.mxu0 0
    %686 = vmatpush1.bf16.msra.mxu0 0
    %687 = vmatprep.subr.bf16.mxu0 0
    %688 = vmatpush1.bf16.msra.mxu0 0
    %689 = vmatprep.mubr.bf16.mxu0 0
    %690 = vmatmul.mubr.bf16.gmra.mrb[0].mxu0 %v206
    %v691 = vpop.f32.mrb[0].mxu0
    %v692 = vadd.f32 %v189, %v691
    %v693 = vpop.f32.mrb[0].mxu0
    %v694 = vadd.f32 %v193, %v693
    %v695 = vpop.f32.mrb[0].mxu0
    %v696 = vadd.f32 %v189, %v695
    %v697 = vpop.f32.mrb[0].mxu0
    %v698 = vadd.f32 %v193, %v697
    %699 = vdwg.mxu0
    %v700 = vmax.f32 %v563, 0.0
    %v701 = vmax.f32 %v565, 0.0
    %v702 = vmax.f32 %v606, 0.0
    %v703 = vmax.f32 %v608, 0.0
    %v704 = vmax.f32 %v649, 0.0
    %v705 = vmax.f32 %v651, 0.0
    %v706 = vmax.f32 %v692, 0.0
    %v707 = vmax.f32 %v694, 0.0
    %v708 = vmax.f32 %v567, 0.0
    %v709 = vmax.f32 %v569, 0.0
    %v710 = vmax.f32 %v610, 0.0
    %v711 = vmax.f32 %v612, 0.0
    %v712 = vmax.f32 %v653, 0.0
    %v713 = vmax.f32 %v655, 0.0
    %v714 = vmax.f32 %v696, 0.0
    %v715 = vmax.f32 %v698, 0.0
    %v716 = vpack.c.bf16 %v708, %v700
    %v717 = vpack.c.bf16 %v709, %v701
    %v718 = vpack.c.bf16 %v710, %v702
    %v719 = vpack.c.bf16 %v711, %v703
    %v720 = vpack.c.bf16 %v712, %v704
    %v721 = vpack.c.bf16 %v713, %v705
    %v722 = vpack.c.bf16 %v714, %v706
    %v723 = vpack.c.bf16 %v715, %v707
    %v724 = vld [vmem:[#allocation8] sm:$0xff]
    %v725 = vld [vmem:[#allocation8 + $0x8] sm:$0xff]
    %v726 = vld [vmem:[#allocation8 + $0x10] sm:$0xff]
    %v727 = vld [vmem:[#allocation8 + $0x18] sm:$0xff]
    %v728 = vld [vmem:[#allocation8 + $0x20] sm:$0xff]
    %v729 = vld [vmem:[#allocation8 + $0x28] sm:$0xff]
    %v730 = vld [vmem:[#allocation8 + $0x30] sm:$0xff]
    %v731 = vld [vmem:[#allocation8 + $0x38] sm:$0xff]
    %v732 = vld [vmem:[#allocation8 + $0x40] sm:$0xff]
    %v733 = vld [vmem:[#allocation8 + $0x48] sm:$0xff]
    %v734 = vld [vmem:[#allocation8 + $0x50] sm:$0xff]
    %v735 = vld [vmem:[#allocation8 + $0x58] sm:$0xff]
    %v736 = vld [vmem:[#allocation8 + $0x60] sm:$0xff]
    %v737 = vld [vmem:[#allocation8 + $0x68] sm:$0xff]
    %v738 = vld [vmem:[#allocation8 + $0x70] sm:$0xff]
    %v739 = vld [vmem:[#allocation8 + $0x78] sm:$0xff]
    %v740 = vld [vmem:[#allocation8 + $0x80] sm:$0xff]
    %v741 = vld [vmem:[#allocation8 + $0x88] sm:$0xff]
    %v742 = vld [vmem:[#allocation8 + $0x90] sm:$0xff]
    %v743 = vld [vmem:[#allocation8 + $0x98] sm:$0xff]
    %v744 = vld [vmem:[#allocation8 + $0xa0] sm:$0xff]
    %v745 = vld [vmem:[#allocation8 + $0xa8] sm:$0xff]
    %v746 = vld [vmem:[#allocation8 + $0xb0] sm:$0xff]
    %v747 = vld [vmem:[#allocation8 + $0xb8] sm:$0xff]
    %v748 = vld [vmem:[#allocation8 + $0xc0] sm:$0xff]
    %v749 = vld [vmem:[#allocation8 + $0xc8] sm:$0xff]
    %v750 = vld [vmem:[#allocation8 + $0xd0] sm:$0xff]
    %v751 = vld [vmem:[#allocation8 + $0xd8] sm:$0xff]
    %v752 = vld [vmem:[#allocation8 + $0xe0] sm:$0xff]
    %v753 = vld [vmem:[#allocation8 + $0xe8] sm:$0xff]
    %v754 = vld [vmem:[#allocation8 + $0xf0] sm:$0xff]
    %v755 = vld [vmem:[#allocation8 + $0xf8] sm:$0xff]
    %v756 = vld [vmem:[#allocation8 + $0x100] sm:$0xff]
    %v757 = vld [vmem:[#allocation8 + $0x108] sm:$0xff]
    %v758 = vld [vmem:[#allocation8 + $0x110] sm:$0xff]
    %v759 = vld [vmem:[#allocation8 + $0x118] sm:$0xff]
    %v760 = vld [vmem:[#allocation8 + $0x120] sm:$0xff]
    %v761 = vld [vmem:[#allocation8 + $0x128] sm:$0xff]
    %v762 = vld [vmem:[#allocation8 + $0x130] sm:$0xff]
    %v763 = vld [vmem:[#allocation8 + $0x138] sm:$0xff]
    %v764 = vld [vmem:[#allocation8 + $0x140] sm:$0xff]
    %v765 = vld [vmem:[#allocation8 + $0x148] sm:$0xff]
    %v766 = vld [vmem:[#allocation8 + $0x150] sm:$0xff]
    %v767 = vld [vmem:[#allocation8 + $0x158] sm:$0xff]
    %v768 = vld [vmem:[#allocation8 + $0x160] sm:$0xff]
    %v769 = vld [vmem:[#allocation8 + $0x168] sm:$0xff]
    %v770 = vld [vmem:[#allocation8 + $0x170] sm:$0xff]
    %v771 = vld [vmem:[#allocation8 + $0x178] sm:$0xff]
    %v772 = vld [vmem:[#allocation8 + $0x180] sm:$0xff]
    %v773 = vld [vmem:[#allocation8 + $0x188] sm:$0xff]
    %v774 = vld [vmem:[#allocation8 + $0x190] sm:$0xff]
    %v775 = vld [vmem:[#allocation8 + $0x198] sm:$0xff]
    %v776 = vld [vmem:[#allocation8 + $0x1a0] sm:$0xff]
    %v777 = vld [vmem:[#allocation8 + $0x1a8] sm:$0xff]
    %v778 = vld [vmem:[#allocation8 + $0x1b0] sm:$0xff]
    %v779 = vld [vmem:[#allocation8 + $0x1b8] sm:$0xff]
    %v780 = vld [vmem:[#allocation8 + $0x1c0] sm:$0xff]
    %v781 = vld [vmem:[#allocation8 + $0x1c8] sm:$0xff]
    %v782 = vld [vmem:[#allocation8 + $0x1d0] sm:$0xff]
    %v783 = vld [vmem:[#allocation8 + $0x1d8] sm:$0xff]
    %v784 = vld [vmem:[#allocation8 + $0x1e0] sm:$0xff]
    %v785 = vld [vmem:[#allocation8 + $0x1e8] sm:$0xff]
    %v786 = vld [vmem:[#allocation8 + $0x1f0] sm:$0xff]
    %v787 = vld [vmem:[#allocation8 + $0x1f8] sm:$0xff]
    %v788 = vld [vmem:[#allocation8 + $0x200] sm:$0xff]
    %v789 = vld [vmem:[#allocation8 + $0x208] sm:$0xff]
    %v790 = vld [vmem:[#allocation8 + $0x210] sm:$0xff]
    %v791 = vld [vmem:[#allocation8 + $0x218] sm:$0xff]
    %v792 = vld [vmem:[#allocation8 + $0x220] sm:$0xff]
    %v793 = vld [vmem:[#allocation8 + $0x228] sm:$0xff]
    %v794 = vld [vmem:[#allocation8 + $0x230] sm:$0xff]
    %v795 = vld [vmem:[#allocation8 + $0x238] sm:$0xff]
    %v796 = vld [vmem:[#allocation8 + $0x240] sm:$0xff]
    %v797 = vld [vmem:[#allocation8 + $0x248] sm:$0xff]
    %v798 = vld [vmem:[#allocation8 + $0x250] sm:$0xff]
    %v799 = vld [vmem:[#allocation8 + $0x258] sm:$0xff]
    %v800 = vld [vmem:[#allocation8 + $0x260] sm:$0xff]
    %v801 = vld [vmem:[#allocation8 + $0x268] sm:$0xff]
    %v802 = vld [vmem:[#allocation8 + $0x270] sm:$0xff]
    %v803 = vld [vmem:[#allocation8 + $0x278] sm:$0xff]
    %v804 = vld [vmem:[#allocation8 + $0x280] sm:$0xff]
    %v805 = vld [vmem:[#allocation8 + $0x288] sm:$0xff]
    %v806 = vld [vmem:[#allocation8 + $0x290] sm:$0xff]
    %v807 = vld [vmem:[#allocation8 + $0x298] sm:$0xff]
    %v808 = vld [vmem:[#allocation8 + $0x2a0] sm:$0xff]
    %v809 = vld [vmem:[#allocation8 + $0x2a8] sm:$0xff]
    %v810 = vld [vmem:[#allocation8 + $0x2b0] sm:$0xff]
    %v811 = vld [vmem:[#allocation8 + $0x2b8] sm:$0xff]
    %v812 = vld [vmem:[#allocation8 + $0x2c0] sm:$0xff]
    %v813 = vld [vmem:[#allocation8 + $0x2c8] sm:$0xff]
    %v814 = vld [vmem:[#allocation8 + $0x2d0] sm:$0xff]
    %v815 = vld [vmem:[#allocation8 + $0x2d8] sm:$0xff]
    %v816 = vld [vmem:[#allocation8 + $0x2e0] sm:$0xff]
    %v817 = vld [vmem:[#allocation8 + $0x2e8] sm:$0xff]
    %v818 = vld [vmem:[#allocation8 + $0x2f0] sm:$0xff]
    %v819 = vld [vmem:[#allocation8 + $0x2f8] sm:$0xff]
    %v820 = vld [vmem:[#allocation8 + $0x300] sm:$0xff]
    %v821 = vld [vmem:[#allocation8 + $0x308] sm:$0xff]
    %v822 = vld [vmem:[#allocation8 + $0x310] sm:$0xff]
    %v823 = vld [vmem:[#allocation8 + $0x318] sm:$0xff]
    %v824 = vld [vmem:[#allocation8 + $0x320] sm:$0xff]
    %v825 = vld [vmem:[#allocation8 + $0x328] sm:$0xff]
    %v826 = vld [vmem:[#allocation8 + $0x330] sm:$0xff]
    %v827 = vld [vmem:[#allocation8 + $0x338] sm:$0xff]
    %v828 = vld [vmem:[#allocation8 + $0x340] sm:$0xff]
    %v829 = vld [vmem:[#allocation8 + $0x348] sm:$0xff]
    %v830 = vld [vmem:[#allocation8 + $0x350] sm:$0xff]
    %v831 = vld [vmem:[#allocation8 + $0x358] sm:$0xff]
    %v832 = vld [vmem:[#allocation8 + $0x360] sm:$0xff]
    %v833 = vld [vmem:[#allocation8 + $0x368] sm:$0xff]
    %v834 = vld [vmem:[#allocation8 + $0x370] sm:$0xff]
    %v835 = vld [vmem:[#allocation8 + $0x378] sm:$0xff]
    %v836 = vld [vmem:[#allocation8 + $0x380] sm:$0xff]
    %v837 = vld [vmem:[#allocation8 + $0x388] sm:$0xff]
    %v838 = vld [vmem:[#allocation8 + $0x390] sm:$0xff]
    %v839 = vld [vmem:[#allocation8 + $0x398] sm:$0xff]
    %v840 = vld [vmem:[#allocation8 + $0x3a0] sm:$0xff]
    %v841 = vld [vmem:[#allocation8 + $0x3a8] sm:$0xff]
    %v842 = vld [vmem:[#allocation8 + $0x3b0] sm:$0xff]
    %v843 = vld [vmem:[#allocation8 + $0x3b8] sm:$0xff]
    %v844 = vld [vmem:[#allocation8 + $0x3c0] sm:$0xff]
    %v845 = vld [vmem:[#allocation8 + $0x3c8] sm:$0xff]
    %v846 = vld [vmem:[#allocation8 + $0x3d0] sm:$0xff]
    %v847 = vld [vmem:[#allocation8 + $0x3d8] sm:$0xff]
    %v848 = vld [vmem:[#allocation8 + $0x3e0] sm:$0xff]
    %v849 = vld [vmem:[#allocation8 + $0x3e8] sm:$0xff]
    %v850 = vld [vmem:[#allocation8 + $0x3f0] sm:$0xff]
    %v851 = vld [vmem:[#allocation8 + $0x3f8] sm:$0xff]
    %v852 = vld [vmem:[%s4] sm:$0x3]
    %v854 = vlaneseq
    %v855 = vshrl.u32 %v854, 7
    %v856 = vsub.s32 0, %v855
    %v857 = vrot.slane %v852, %v856
    %v858 = vlaneseq
    %v859 = vshrl.u32 %v858, 7
    %v860 = vsub.s32 1, %v859
    %v861 = vrot.slane %v852, %v860
    %v992 = vunpack.c.l.b16 %v724
    %v993 = vunpack.c.h.b16 %v724
    %v994 = vunpack.c.l.b16 %v725
    %v995 = vunpack.c.h.b16 %v725
    %v996 = vunpack.c.l.b16 %v726
    %v997 = vunpack.c.h.b16 %v726
    %v998 = vunpack.c.l.b16 %v727
    %v999 = vunpack.c.h.b16 %v727
    %v1000 = vunpack.c.l.b16 %v728
    %v1001 = vunpack.c.h.b16 %v728
    %v1002 = vunpack.c.l.b16 %v729
    %v1003 = vunpack.c.h.b16 %v729
    %v1004 = vunpack.c.l.b16 %v730
    %v1005 = vunpack.c.h.b16 %v730
    %v1006 = vunpack.c.l.b16 %v731
    %v1007 = vunpack.c.h.b16 %v731
    %v1008 = vunpack.c.l.b16 %v732
    %v1009 = vunpack.c.h.b16 %v732
    %v1010 = vunpack.c.l.b16 %v733
    %v1011 = vunpack.c.h.b16 %v733
    %v1012 = vunpack.c.l.b16 %v734
    %v1013 = vunpack.c.h.b16 %v734
    %v1014 = vunpack.c.l.b16 %v735
    %v1015 = vunpack.c.h.b16 %v735
    %v1016 = vunpack.c.l.b16 %v736
    %v1017 = vunpack.c.h.b16 %v736
    %v1018 = vunpack.c.l.b16 %v737
    %v1019 = vunpack.c.h.b16 %v737
    %v1020 = vunpack.c.l.b16 %v738
    %v1021 = vunpack.c.h.b16 %v738
    %v1022 = vunpack.c.l.b16 %v739
    %v1023 = vunpack.c.h.b16 %v739
    %v1024 = vunpack.c.l.b16 %v740
    %v1025 = vunpack.c.h.b16 %v740
    %v1026 = vunpack.c.l.b16 %v741
    %v1027 = vunpack.c.h.b16 %v741
    %v1028 = vunpack.c.l.b16 %v742
    %v1029 = vunpack.c.h.b16 %v742
    %v1030 = vunpack.c.l.b16 %v743
    %v1031 = vunpack.c.h.b16 %v743
    %v1032 = vunpack.c.l.b16 %v744
    %v1033 = vunpack.c.h.b16 %v744
    %v1034 = vunpack.c.l.b16 %v745
    %v1035 = vunpack.c.h.b16 %v745
    %v1036 = vunpack.c.l.b16 %v746
    %v1037 = vunpack.c.h.b16 %v746
    %v1038 = vunpack.c.l.b16 %v747
    %v1039 = vunpack.c.h.b16 %v747
    %v1040 = vunpack.c.l.b16 %v748
    %v1041 = vunpack.c.h.b16 %v748
    %v1042 = vunpack.c.l.b16 %v749
    %v1043 = vunpack.c.h.b16 %v749
    %v1044 = vunpack.c.l.b16 %v750
    %v1045 = vunpack.c.h.b16 %v750
    %v1046 = vunpack.c.l.b16 %v751
    %v1047 = vunpack.c.h.b16 %v751
    %v1048 = vunpack.c.l.b16 %v752
    %v1049 = vunpack.c.h.b16 %v752
    %v1050 = vunpack.c.l.b16 %v753
    %v1051 = vunpack.c.h.b16 %v753
    %v1052 = vunpack.c.l.b16 %v754
    %v1053 = vunpack.c.h.b16 %v754
    %v1054 = vunpack.c.l.b16 %v755
    %v1055 = vunpack.c.h.b16 %v755
    %v1056 = vunpack.c.l.b16 %v756
    %v1057 = vunpack.c.h.b16 %v756
    %v1058 = vunpack.c.l.b16 %v757
    %v1059 = vunpack.c.h.b16 %v757
    %v1060 = vunpack.c.l.b16 %v758
    %v1061 = vunpack.c.h.b16 %v758
    %v1062 = vunpack.c.l.b16 %v759
    %v1063 = vunpack.c.h.b16 %v759
    %v1064 = vunpack.c.l.b16 %v760
    %v1065 = vunpack.c.h.b16 %v760
    %v1066 = vunpack.c.l.b16 %v761
    %v1067 = vunpack.c.h.b16 %v761
    %v1068 = vunpack.c.l.b16 %v762
    %v1069 = vunpack.c.h.b16 %v762
    %v1070 = vunpack.c.l.b16 %v763
    %v1071 = vunpack.c.h.b16 %v763
    %v1072 = vunpack.c.l.b16 %v764
    %v1073 = vunpack.c.h.b16 %v764
    %v1074 = vunpack.c.l.b16 %v765
    %v1075 = vunpack.c.h.b16 %v765
    %v1076 = vunpack.c.l.b16 %v766
    %v1077 = vunpack.c.h.b16 %v766
    %v1078 = vunpack.c.l.b16 %v767
    %v1079 = vunpack.c.h.b16 %v767
    %v1080 = vunpack.c.l.b16 %v768
    %v1081 = vunpack.c.h.b16 %v768
    %v1082 = vunpack.c.l.b16 %v769
    %v1083 = vunpack.c.h.b16 %v769
    %v1084 = vunpack.c.l.b16 %v770
    %v1085 = vunpack.c.h.b16 %v770
    %v1086 = vunpack.c.l.b16 %v771
    %v1087 = vunpack.c.h.b16 %v771
    %v1088 = vunpack.c.l.b16 %v772
    %v1089 = vunpack.c.h.b16 %v772
    %v1090 = vunpack.c.l.b16 %v773
    %v1091 = vunpack.c.h.b16 %v773
    %v1092 = vunpack.c.l.b16 %v774
    %v1093 = vunpack.c.h.b16 %v774
    %v1094 = vunpack.c.l.b16 %v775
    %v1095 = vunpack.c.h.b16 %v775
    %v1096 = vunpack.c.l.b16 %v776
    %v1097 = vunpack.c.h.b16 %v776
    %v1098 = vunpack.c.l.b16 %v777
    %v1099 = vunpack.c.h.b16 %v777
    %v1100 = vunpack.c.l.b16 %v778
    %v1101 = vunpack.c.h.b16 %v778
    %v1102 = vunpack.c.l.b16 %v779
    %v1103 = vunpack.c.h.b16 %v779
    %v1104 = vunpack.c.l.b16 %v780
    %v1105 = vunpack.c.h.b16 %v780
    %v1106 = vunpack.c.l.b16 %v781
    %v1107 = vunpack.c.h.b16 %v781
    %v1108 = vunpack.c.l.b16 %v782
    %v1109 = vunpack.c.h.b16 %v782
    %v1110 = vunpack.c.l.b16 %v783
    %v1111 = vunpack.c.h.b16 %v783
    %v1112 = vunpack.c.l.b16 %v784
    %v1113 = vunpack.c.h.b16 %v784
    %v1114 = vunpack.c.l.b16 %v785
    %v1115 = vunpack.c.h.b16 %v785
    %v1116 = vunpack.c.l.b16 %v786
    %v1117 = vunpack.c.h.b16 %v786
    %v1118 = vunpack.c.l.b16 %v787
    %v1119 = vunpack.c.h.b16 %v787
    %v1120 = vunpack.c.l.b16 %v788
    %v1121 = vunpack.c.h.b16 %v788
    %v1122 = vunpack.c.l.b16 %v789
    %v1123 = vunpack.c.h.b16 %v789
    %v1124 = vunpack.c.l.b16 %v790
    %v1125 = vunpack.c.h.b16 %v790
    %v1126 = vunpack.c.l.b16 %v791
    %v1127 = vunpack.c.h.b16 %v791
    %v1128 = vunpack.c.l.b16 %v792
    %v1129 = vunpack.c.h.b16 %v792
    %v1130 = vunpack.c.l.b16 %v793
    %v1131 = vunpack.c.h.b16 %v793
    %v1132 = vunpack.c.l.b16 %v794
    %v1133 = vunpack.c.h.b16 %v794
    %v1134 = vunpack.c.l.b16 %v795
    %v1135 = vunpack.c.h.b16 %v795
    %v1136 = vunpack.c.l.b16 %v796
    %v1137 = vunpack.c.h.b16 %v796
    %v1138 = vunpack.c.l.b16 %v797
    %v1139 = vunpack.c.h.b16 %v797
    %v1140 = vunpack.c.l.b16 %v798
    %v1141 = vunpack.c.h.b16 %v798
    %v1142 = vunpack.c.l.b16 %v799
    %v1143 = vunpack.c.h.b16 %v799
    %v1144 = vunpack.c.l.b16 %v800
    %v1145 = vunpack.c.h.b16 %v800
    %v1146 = vunpack.c.l.b16 %v801
    %v1147 = vunpack.c.h.b16 %v801
    %v1148 = vunpack.c.l.b16 %v802
    %v1149 = vunpack.c.h.b16 %v802
    %v1150 = vunpack.c.l.b16 %v803
    %v1151 = vunpack.c.h.b16 %v803
    %v1152 = vunpack.c.l.b16 %v804
    %v1153 = vunpack.c.h.b16 %v804
    %v1154 = vunpack.c.l.b16 %v805
    %v1155 = vunpack.c.h.b16 %v805
    %v1156 = vunpack.c.l.b16 %v806
    %v1157 = vunpack.c.h.b16 %v806
    %v1158 = vunpack.c.l.b16 %v807
    %v1159 = vunpack.c.h.b16 %v807
    %v1160 = vunpack.c.l.b16 %v808
    %v1161 = vunpack.c.h.b16 %v808
    %v1162 = vunpack.c.l.b16 %v809
    %v1163 = vunpack.c.h.b16 %v809
    %v1164 = vunpack.c.l.b16 %v810
    %v1165 = vunpack.c.h.b16 %v810
    %v1166 = vunpack.c.l.b16 %v811
    %v1167 = vunpack.c.h.b16 %v811
    %v1168 = vunpack.c.l.b16 %v812
    %v1169 = vunpack.c.h.b16 %v812
    %v1170 = vunpack.c.l.b16 %v813
    %v1171 = vunpack.c.h.b16 %v813
    %v1172 = vunpack.c.l.b16 %v814
    %v1173 = vunpack.c.h.b16 %v814
    %v1174 = vunpack.c.l.b16 %v815
    %v1175 = vunpack.c.h.b16 %v815
    %v1176 = vunpack.c.l.b16 %v816
    %v1177 = vunpack.c.h.b16 %v816
    %v1178 = vunpack.c.l.b16 %v817
    %v1179 = vunpack.c.h.b16 %v817
    %v1180 = vunpack.c.l.b16 %v818
    %v1181 = vunpack.c.h.b16 %v818
    %v1182 = vunpack.c.l.b16 %v819
    %v1183 = vunpack.c.h.b16 %v819
    %v1184 = vunpack.c.l.b16 %v820
    %v1185 = vunpack.c.h.b16 %v820
    %v1186 = vunpack.c.l.b16 %v821
    %v1187 = vunpack.c.h.b16 %v821
    %v1188 = vunpack.c.l.b16 %v822
    %v1189 = vunpack.c.h.b16 %v822
    %v1190 = vunpack.c.l.b16 %v823
    %v1191 = vunpack.c.h.b16 %v823
    %v1192 = vunpack.c.l.b16 %v824
    %v1193 = vunpack.c.h.b16 %v824
    %v1194 = vunpack.c.l.b16 %v825
    %v1195 = vunpack.c.h.b16 %v825
    %v1196 = vunpack.c.l.b16 %v826
    %v1197 = vunpack.c.h.b16 %v826
    %v1198 = vunpack.c.l.b16 %v827
    %v1199 = vunpack.c.h.b16 %v827
    %v1200 = vunpack.c.l.b16 %v828
    %v1201 = vunpack.c.h.b16 %v828
    %v1202 = vunpack.c.l.b16 %v829
    %v1203 = vunpack.c.h.b16 %v829
    %v1204 = vunpack.c.l.b16 %v830
    %v1205 = vunpack.c.h.b16 %v830
    %v1206 = vunpack.c.l.b16 %v831
    %v1207 = vunpack.c.h.b16 %v831
    %v1208 = vunpack.c.l.b16 %v832
    %v1209 = vunpack.c.h.b16 %v832
    %v1210 = vunpack.c.l.b16 %v833
    %v1211 = vunpack.c.h.b16 %v833
    %v1212 = vunpack.c.l.b16 %v834
    %v1213 = vunpack.c.h.b16 %v834
    %v1214 = vunpack.c.l.b16 %v835
    %v1215 = vunpack.c.h.b16 %v835
    %v1216 = vunpack.c.l.b16 %v836
    %v1217 = vunpack.c.h.b16 %v836
    %v1218 = vunpack.c.l.b16 %v837
    %v1219 = vunpack.c.h.b16 %v837
    %v1220 = vunpack.c.l.b16 %v838
    %v1221 = vunpack.c.h.b16 %v838
    %v1222 = vunpack.c.l.b16 %v839
    %v1223 = vunpack.c.h.b16 %v839
    %v1224 = vunpack.c.l.b16 %v840
    %v1225 = vunpack.c.h.b16 %v840
    %v1226 = vunpack.c.l.b16 %v841
    %v1227 = vunpack.c.h.b16 %v841
    %v1228 = vunpack.c.l.b16 %v842
    %v1229 = vunpack.c.h.b16 %v842
    %v1230 = vunpack.c.l.b16 %v843
    %v1231 = vunpack.c.h.b16 %v843
    %v1232 = vunpack.c.l.b16 %v844
    %v1233 = vunpack.c.h.b16 %v844
    %v1234 = vunpack.c.l.b16 %v845
    %v1235 = vunpack.c.h.b16 %v845
    %v1236 = vunpack.c.l.b16 %v846
    %v1237 = vunpack.c.h.b16 %v846
    %v1238 = vunpack.c.l.b16 %v847
    %v1239 = vunpack.c.h.b16 %v847
    %v1240 = vunpack.c.l.b16 %v848
    %v1241 = vunpack.c.h.b16 %v848
    %v1242 = vunpack.c.l.b16 %v849
    %v1243 = vunpack.c.h.b16 %v849
    %v1244 = vunpack.c.l.b16 %v850
    %v1245 = vunpack.c.h.b16 %v850
    %v1246 = vunpack.c.l.b16 %v851
    %v1247 = vunpack.c.h.b16 %v851
    %v1248 = vpack.c.b16 %v994, %v992
    %v1249 = vpack.c.b16 %v995, %v993
    %v1250 = vpack.c.b16 %v998, %v996
    %v1251 = vpack.c.b16 %v999, %v997
    %v1252 = vpack.c.b16 %v1002, %v1000
    %v1253 = vpack.c.b16 %v1003, %v1001
    %v1254 = vpack.c.b16 %v1006, %v1004
    %v1255 = vpack.c.b16 %v1007, %v1005
    %v1256 = vpack.c.b16 %v1010, %v1008
    %v1257 = vpack.c.b16 %v1011, %v1009
    %v1258 = vpack.c.b16 %v1014, %v1012
    %v1259 = vpack.c.b16 %v1015, %v1013
    %v1260 = vpack.c.b16 %v1018, %v1016
    %v1261 = vpack.c.b16 %v1019, %v1017
    %v1262 = vpack.c.b16 %v1022, %v1020
    %v1263 = vpack.c.b16 %v1023, %v1021
    %v1264 = vpack.c.b16 %v1026, %v1024
    %v1265 = vpack.c.b16 %v1027, %v1025
    %v1266 = vpack.c.b16 %v1030, %v1028
    %v1267 = vpack.c.b16 %v1031, %v1029
    %v1268 = vpack.c.b16 %v1034, %v1032
    %v1269 = vpack.c.b16 %v1035, %v1033
    %v1270 = vpack.c.b16 %v1038, %v1036
    %v1271 = vpack.c.b16 %v1039, %v1037
    %v1272 = vpack.c.b16 %v1042, %v1040
    %v1273 = vpack.c.b16 %v1043, %v1041
    %v1274 = vpack.c.b16 %v1046, %v1044
    %v1275 = vpack.c.b16 %v1047, %v1045
    %v1276 = vpack.c.b16 %v1050, %v1048
    %v1277 = vpack.c.b16 %v1051, %v1049
    %v1278 = vpack.c.b16 %v1054, %v1052
    %v1279 = vpack.c.b16 %v1055, %v1053
    %v1280 = vpack.c.b16 %v1058, %v1056
    %v1281 = vpack.c.b16 %v1059, %v1057
    %v1282 = vpack.c.b16 %v1062, %v1060
    %v1283 = vpack.c.b16 %v1063, %v1061
    %v1284 = vpack.c.b16 %v1066, %v1064
    %v1285 = vpack.c.b16 %v1067, %v1065
    %v1286 = vpack.c.b16 %v1070, %v1068
    %v1287 = vpack.c.b16 %v1071, %v1069
    %v1288 = vpack.c.b16 %v1074, %v1072
    %v1289 = vpack.c.b16 %v1075, %v1073
    %v1290 = vpack.c.b16 %v1078, %v1076
    %v1291 = vpack.c.b16 %v1079, %v1077
    %v1292 = vpack.c.b16 %v1082, %v1080
    %v1293 = vpack.c.b16 %v1083, %v1081
    %v1294 = vpack.c.b16 %v1086, %v1084
    %v1295 = vpack.c.b16 %v1087, %v1085
    %v1296 = vpack.c.b16 %v1090, %v1088
    %v1297 = vpack.c.b16 %v1091, %v1089
    %v1298 = vpack.c.b16 %v1094, %v1092
    %v1299 = vpack.c.b16 %v1095, %v1093
    %v1300 = vpack.c.b16 %v1098, %v1096
    %v1301 = vpack.c.b16 %v1099, %v1097
    %v1302 = vpack.c.b16 %v1102, %v1100
    %v1303 = vpack.c.b16 %v1103, %v1101
    %v1304 = vpack.c.b16 %v1106, %v1104
    %v1305 = vpack.c.b16 %v1107, %v1105
    %v1306 = vpack.c.b16 %v1110, %v1108
    %v1307 = vpack.c.b16 %v1111, %v1109
    %v1308 = vpack.c.b16 %v1114, %v1112
    %v1309 = vpack.c.b16 %v1115, %v1113
    %v1310 = vpack.c.b16 %v1118, %v1116
    %v1311 = vpack.c.b16 %v1119, %v1117
    %v1312 = vpack.c.b16 %v1122, %v1120
    %v1313 = vpack.c.b16 %v1123, %v1121
    %v1314 = vpack.c.b16 %v1126, %v1124
    %v1315 = vpack.c.b16 %v1127, %v1125
    %v1316 = vpack.c.b16 %v1130, %v1128
    %v1317 = vpack.c.b16 %v1131, %v1129
    %v1318 = vpack.c.b16 %v1134, %v1132
    %v1319 = vpack.c.b16 %v1135, %v1133
    %v1320 = vpack.c.b16 %v1138, %v1136
    %v1321 = vpack.c.b16 %v1139, %v1137
    %v1322 = vpack.c.b16 %v1142, %v1140
    %v1323 = vpack.c.b16 %v1143, %v1141
    %v1324 = vpack.c.b16 %v1146, %v1144
    %v1325 = vpack.c.b16 %v1147, %v1145
    %v1326 = vpack.c.b16 %v1150, %v1148
    %v1327 = vpack.c.b16 %v1151, %v1149
    %v1328 = vpack.c.b16 %v1154, %v1152
    %v1329 = vpack.c.b16 %v1155, %v1153
    %v1330 = vpack.c.b16 %v1158, %v1156
    %v1331 = vpack.c.b16 %v1159, %v1157
    %v1332 = vpack.c.b16 %v1162, %v1160
    %v1333 = vpack.c.b16 %v1163, %v1161
    %v1334 = vpack.c.b16 %v1166, %v1164
    %v1335 = vpack.c.b16 %v1167, %v1165
    %v1336 = vpack.c.b16 %v1170, %v1168
    %v1337 = vpack.c.b16 %v1171, %v1169
    %v1338 = vpack.c.b16 %v1174, %v1172
    %v1339 = vpack.c.b16 %v1175, %v1173
    %v1340 = vpack.c.b16 %v1178, %v1176
    %v1341 = vpack.c.b16 %v1179, %v1177
    %v1342 = vpack.c.b16 %v1182, %v1180
    %v1343 = vpack.c.b16 %v1183, %v1181
    %v1344 = vpack.c.b16 %v1186, %v1184
    %v1345 = vpack.c.b16 %v1187, %v1185
    %v1346 = vpack.c.b16 %v1190, %v1188
    %v1347 = vpack.c.b16 %v1191, %v1189
    %v1348 = vpack.c.b16 %v1194, %v1192
    %v1349 = vpack.c.b16 %v1195, %v1193
    %v1350 = vpack.c.b16 %v1198, %v1196
    %v1351 = vpack.c.b16 %v1199, %v1197
    %v1352 = vpack.c.b16 %v1202, %v1200
    %v1353 = vpack.c.b16 %v1203, %v1201
    %v1354 = vpack.c.b16 %v1206, %v1204
    %v1355 = vpack.c.b16 %v1207, %v1205
    %v1356 = vpack.c.b16 %v1210, %v1208
    %v1357 = vpack.c.b16 %v1211, %v1209
    %v1358 = vpack.c.b16 %v1214, %v1212
    %v1359 = vpack.c.b16 %v1215, %v1213
    %v1360 = vpack.c.b16 %v1218, %v1216
    %v1361 = vpack.c.b16 %v1219, %v1217
    %v1362 = vpack.c.b16 %v1222, %v1220
    %v1363 = vpack.c.b16 %v1223, %v1221
    %v1364 = vpack.c.b16 %v1226, %v1224
    %v1365 = vpack.c.b16 %v1227, %v1225
    %v1366 = vpack.c.b16 %v1230, %v1228
    %v1367 = vpack.c.b16 %v1231, %v1229
    %v1368 = vpack.c.b16 %v1234, %v1232
    %v1369 = vpack.c.b16 %v1235, %v1233
    %v1370 = vpack.c.b16 %v1238, %v1236
    %v1371 = vpack.c.b16 %v1239, %v1237
    %v1372 = vpack.c.b16 %v1242, %v1240
    %v1373 = vpack.c.b16 %v1243, %v1241
    %v1374 = vpack.c.b16 %v1246, %v1244
    %v1375 = vpack.c.b16 %v1247, %v1245
    %1504 = vmatprep.subr.bf16.mxu0 %v1249
    %1505 = vmatpush1.bf16.msra.mxu0 %v1248
    %1506 = vmatprep.subr.bf16.mxu0 %v1251
    %1507 = vmatpush1.bf16.msra.mxu0 %v1250
    %1508 = vmatprep.subr.bf16.mxu0 %v1253
    %1509 = vmatpush1.bf16.msra.mxu0 %v1252
    %1510 = vmatprep.subr.bf16.mxu0 %v1255
    %1511 = vmatpush1.bf16.msra.mxu0 %v1254
    %1512 = vmatprep.subr.bf16.mxu0 %v1257
    %1513 = vmatpush1.bf16.msra.mxu0 %v1256
    %1514 = vmatprep.subr.bf16.mxu0 %v1259
    %1515 = vmatpush1.bf16.msra.mxu0 %v1258
    %1516 = vmatprep.subr.bf16.mxu0 %v1261
    %1517 = vmatpush1.bf16.msra.mxu0 %v1260
    %1518 = vmatprep.subr.bf16.mxu0 %v1263
    %1519 = vmatpush1.bf16.msra.mxu0 %v1262
    %1520 = vmatprep.subr.bf16.mxu0 %v1265
    %1521 = vmatpush1.bf16.msra.mxu0 %v1264
    %1522 = vmatprep.subr.bf16.mxu0 %v1267
    %1523 = vmatpush1.bf16.msra.mxu0 %v1266
    %1524 = vmatprep.subr.bf16.mxu0 %v1269
    %1525 = vmatpush1.bf16.msra.mxu0 %v1268
    %1526 = vmatprep.subr.bf16.mxu0 %v1271
    %1527 = vmatpush1.bf16.msra.mxu0 %v1270
    %1528 = vmatprep.subr.bf16.mxu0 %v1273
    %1529 = vmatpush1.bf16.msra.mxu0 %v1272
    %1530 = vmatprep.subr.bf16.mxu0 %v1275
    %1531 = vmatpush1.bf16.msra.mxu0 %v1274
    %1532 = vmatprep.subr.bf16.mxu0 %v1277
    %1533 = vmatpush1.bf16.msra.mxu0 %v1276
    %1534 = vmatprep.subr.bf16.mxu0 %v1279
    %1535 = vmatpush1.bf16.msra.mxu0 %v1278
    %1536 = vmatprep.mubr.bf16.mxu0 %v717
    %1537 = vmatmul.mubr.bf16.gmra.mrb[0].mxu0 %v716
    %v1538 = vpop.f32.mrb[0].mxu0
    %v1539 = vadd.f32 %v857, %v1538
    %v1540 = vpop.f32.mrb[0].mxu0
    %v1541 = vadd.f32 %v861, %v1540
    %v1542 = vpop.f32.mrb[0].mxu0
    %v1543 = vadd.f32 %v857, %v1542
    %v1544 = vpop.f32.mrb[0].mxu0
    %v1545 = vadd.f32 %v861, %v1544
    %1546 = vdwg.mxu0
    %1547 = vmatprep.subr.bf16.mxu0 %v1281
    %1548 = vmatpush1.bf16.msra.mxu0 %v1280
    %1549 = vmatprep.subr.bf16.mxu0 %v1283
    %1550 = vmatpush1.bf16.msra.mxu0 %v1282
    %1551 = vmatprep.subr.bf16.mxu0 %v1285
    %1552 = vmatpush1.bf16.msra.mxu0 %v1284
    %1553 = vmatprep.subr.bf16.mxu0 %v1287
    %1554 = vmatpush1.bf16.msra.mxu0 %v1286
    %1555 = vmatprep.subr.bf16.mxu0 %v1289
    %1556 = vmatpush1.bf16.msra.mxu0 %v1288
    %1557 = vmatprep.subr.bf16.mxu0 %v1291
    %1558 = vmatpush1.bf16.msra.mxu0 %v1290
    %1559 = vmatprep.subr.bf16.mxu0 %v1293
    %1560 = vmatpush1.bf16.msra.mxu0 %v1292
    %1561 = vmatprep.subr.bf16.mxu0 %v1295
    %1562 = vmatpush1.bf16.msra.mxu0 %v1294
    %1563 = vmatprep.subr.bf16.mxu0 %v1297
    %1564 = vmatpush1.bf16.msra.mxu0 %v1296
    %1565 = vmatprep.subr.bf16.mxu0 %v1299
    %1566 = vmatpush1.bf16.msra.mxu0 %v1298
    %1567 = vmatprep.subr.bf16.mxu0 %v1301
    %1568 = vmatpush1.bf16.msra.mxu0 %v1300
    %1569 = vmatprep.subr.bf16.mxu0 %v1303
    %1570 = vmatpush1.bf16.msra.mxu0 %v1302
    %1571 = vmatprep.subr.bf16.mxu0 %v1305
    %1572 = vmatpush1.bf16.msra.mxu0 %v1304
    %1573 = vmatprep.subr.bf16.mxu0 %v1307
    %1574 = vmatpush1.bf16.msra.mxu0 %v1306
    %1575 = vmatprep.subr.bf16.mxu0 %v1309
    %1576 = vmatpush1.bf16.msra.mxu0 %v1308
    %1577 = vmatprep.subr.bf16.mxu0 %v1311
    %1578 = vmatpush1.bf16.msra.mxu0 %v1310
    %1579 = vmatprep.mubr.bf16.mxu0 %v719
    %1580 = vmatmul.mubr.bf16.gmra.mrb[0].mxu0 %v718
    %v1581 = vpop.f32.mrb[0].mxu0
    %v1582 = vadd.f32 %v1539, %v1581
    %v1583 = vpop.f32.mrb[0].mxu0
    %v1584 = vadd.f32 %v1541, %v1583
    %v1585 = vpop.f32.mrb[0].mxu0
    %v1586 = vadd.f32 %v1543, %v1585
    %v1587 = vpop.f32.mrb[0].mxu0
    %v1588 = vadd.f32 %v1545, %v1587
    %1589 = vdwg.mxu0
    %1590 = vmatprep.subr.bf16.mxu0 %v1313
    %1591 = vmatpush1.bf16.msra.mxu0 %v1312
    %1592 = vmatprep.subr.bf16.mxu0 %v1315
    %1593 = vmatpush1.bf16.msra.mxu0 %v1314
    %1594 = vmatprep.subr.bf16.mxu0 %v1317
    %1595 = vmatpush1.bf16.msra.mxu0 %v1316
    %1596 = vmatprep.subr.bf16.mxu0 %v1319
    %1597 = vmatpush1.bf16.msra.mxu0 %v1318
    %1598 = vmatprep.subr.bf16.mxu0 %v1321
    %1599 = vmatpush1.bf16.msra.mxu0 %v1320
    %1600 = vmatprep.subr.bf16.mxu0 %v1323
    %1601 = vmatpush1.bf16.msra.mxu0 %v1322
    %1602 = vmatprep.subr.bf16.mxu0 %v1325
    %1603 = vmatpush1.bf16.msra.mxu0 %v1324
    %1604 = vmatprep.subr.bf16.mxu0 %v1327
    %1605 = vmatpush1.bf16.msra.mxu0 %v1326
    %1606 = vmatprep.subr.bf16.mxu0 %v1329
    %1607 = vmatpush1.bf16.msra.mxu0 %v1328
    %1608 = vmatprep.subr.bf16.mxu0 %v1331
    %1609 = vmatpush1.bf16.msra.mxu0 %v1330
    %1610 = vmatprep.subr.bf16.mxu0 %v1333
    %1611 = vmatpush1.bf16.msra.mxu0 %v1332
    %1612 = vmatprep.subr.bf16.mxu0 %v1335
    %1613 = vmatpush1.bf16.msra.mxu0 %v1334
    %1614 = vmatprep.subr.bf16.mxu0 %v1337
    %1615 = vmatpush1.bf16.msra.mxu0 %v1336
    %1616 = vmatprep.subr.bf16.mxu0 %v1339
    %1617 = vmatpush1.bf16.msra.mxu0 %v1338
    %1618 = vmatprep.subr.bf16.mxu0 %v1341
    %1619 = vmatpush1.bf16.msra.mxu0 %v1340
    %1620 = vmatprep.subr.bf16.mxu0 %v1343
    %1621 = vmatpush1.bf16.msra.mxu0 %v1342
    %1622 = vmatprep.mubr.bf16.mxu0 %v721
    %1623 = vmatmul.mubr.bf16.gmra.mrb[0].mxu0 %v720
    %v1624 = vpop.f32.mrb[0].mxu0
    %v1625 = vadd.f32 %v1582, %v1624
    %v1626 = vpop.f32.mrb[0].mxu0
    %v1627 = vadd.f32 %v1584, %v1626
    %v1628 = vpop.f32.mrb[0].mxu0
    %v1629 = vadd.f32 %v1586, %v1628
    %v1630 = vpop.f32.mrb[0].mxu0
    %v1631 = vadd.f32 %v1588, %v1630
    %1632 = vdwg.mxu0
    %1633 = vmatprep.subr.bf16.mxu0 %v1345
    %1634 = vmatpush1.bf16.msra.mxu0 %v1344
    %1635 = vmatprep.subr.bf16.mxu0 %v1347
    %1636 = vmatpush1.bf16.msra.mxu0 %v1346
    %1637 = vmatprep.subr.bf16.mxu0 %v1349
    %1638 = vmatpush1.bf16.msra.mxu0 %v1348
    %1639 = vmatprep.subr.bf16.mxu0 %v1351
    %1640 = vmatpush1.bf16.msra.mxu0 %v1350
    %1641 = vmatprep.subr.bf16.mxu0 %v1353
    %1642 = vmatpush1.bf16.msra.mxu0 %v1352
    %1643 = vmatprep.subr.bf16.mxu0 %v1355
    %1644 = vmatpush1.bf16.msra.mxu0 %v1354
    %1645 = vmatprep.subr.bf16.mxu0 %v1357
    %1646 = vmatpush1.bf16.msra.mxu0 %v1356
    %1647 = vmatprep.subr.bf16.mxu0 %v1359
    %1648 = vmatpush1.bf16.msra.mxu0 %v1358
    %1649 = vmatprep.subr.bf16.mxu0 %v1361
    %1650 = vmatpush1.bf16.msra.mxu0 %v1360
    %1651 = vmatprep.subr.bf16.mxu0 %v1363
    %1652 = vmatpush1.bf16.msra.mxu0 %v1362
    %1653 = vmatprep.subr.bf16.mxu0 %v1365
    %1654 = vmatpush1.bf16.msra.mxu0 %v1364
    %1655 = vmatprep.subr.bf16.mxu0 %v1367
    %1656 = vmatpush1.bf16.msra.mxu0 %v1366
    %1657 = vmatprep.subr.bf16.mxu0 %v1369
    %1658 = vmatpush1.bf16.msra.mxu0 %v1368
    %1659 = vmatprep.subr.bf16.mxu0 %v1371
    %1660 = vmatpush1.bf16.msra.mxu0 %v1370
    %1661 = vmatprep.subr.bf16.mxu0 %v1373
    %1662 = vmatpush1.bf16.msra.mxu0 %v1372
    %1663 = vmatprep.subr.bf16.mxu0 %v1375
    %1664 = vmatpush1.bf16.msra.mxu0 %v1374
    %1665 = vmatprep.mubr.bf16.mxu0 %v723
    %1666 = vmatmul.mubr.bf16.gmra.mrb[0].mxu0 %v722
    %v1667 = vpop.f32.mrb[0].mxu0
    %v1668 = vadd.f32 %v1625, %v1667
    %v1669 = vpop.f32.mrb[0].mxu0
    %v1670 = vadd.f32 %v1627, %v1669
    %v1671 = vpop.f32.mrb[0].mxu0
    %v1672 = vadd.f32 %v1629, %v1671
    %v1673 = vpop.f32.mrb[0].mxu0
    %v1674 = vadd.f32 %v1631, %v1673
    %1675 = vdwg.mxu0
    %v1676 = vmax.f32 %v1668, 0.0
    %v1677 = vmax.f32 %v1670, 0.0
    %v1678 = vmax.f32 %v1672, 0.0
    %v1679 = vmax.f32 %v1674, 0.0
    %v1680 = vpack.c.bf16 %v1678, %v1676
    %v1681 = vpack.c.bf16 %v1679, %v1677
    %v1682 = vld [vmem:[#allocation10] sm:$0xf]
    %v1683 = vld [vmem:[#allocation10 + $0x4] sm:$0xf]
    %v1684 = vld [vmem:[#allocation10 + $0x8] sm:$0xf]
    %v1685 = vld [vmem:[#allocation10 + $0xc] sm:$0xf]
    %v1686 = vld [vmem:[#allocation10 + $0x10] sm:$0xf]
    %v1687 = vld [vmem:[#allocation10 + $0x14] sm:$0xf]
    %v1688 = vld [vmem:[#allocation10 + $0x18] sm:$0xf]
    %v1689 = vld [vmem:[#allocation10 + $0x1c] sm:$0xf]
    %v1690 = vld [vmem:[#allocation10 + $0x20] sm:$0xf]
    %v1691 = vld [vmem:[#allocation10 + $0x24] sm:$0xf]
    %v1692 = vld [vmem:[#allocation10 + $0x28] sm:$0xf]
    %v1693 = vld [vmem:[#allocation10 + $0x2c] sm:$0xf]
    %v1694 = vld [vmem:[#allocation10 + $0x30] sm:$0xf]
    %v1695 = vld [vmem:[#allocation10 + $0x34] sm:$0xf]
    %v1696 = vld [vmem:[#allocation10 + $0x38] sm:$0xf]
    %v1697 = vld [vmem:[#allocation10 + $0x3c] sm:$0xf]
    %v1698 = vld [vmem:[#allocation10 + $0x40] sm:$0xf]
    %v1699 = vld [vmem:[#allocation10 + $0x44] sm:$0xf]
    %v1700 = vld [vmem:[#allocation10 + $0x48] sm:$0xf]
    %v1701 = vld [vmem:[#allocation10 + $0x4c] sm:$0xf]
    %v1702 = vld [vmem:[#allocation10 + $0x50] sm:$0xf]
    %v1703 = vld [vmem:[#allocation10 + $0x54] sm:$0xf]
    %v1704 = vld [vmem:[#allocation10 + $0x58] sm:$0xf]
    %v1705 = vld [vmem:[#allocation10 + $0x5c] sm:$0xf]
    %v1706 = vld [vmem:[#allocation10 + $0x60] sm:$0xf]
    %v1707 = vld [vmem:[#allocation10 + $0x64] sm:$0xf]
    %v1708 = vld [vmem:[#allocation10 + $0x68] sm:$0xf]
    %v1709 = vld [vmem:[#allocation10 + $0x6c] sm:$0xf]
    %v1710 = vld [vmem:[#allocation10 + $0x70] sm:$0xf]
    %v1711 = vld [vmem:[#allocation10 + $0x74] sm:$0xf]
    %v1712 = vld [vmem:[#allocation10 + $0x78] sm:$0xf]
    %v1713 = vld [vmem:[#allocation10 + $0x7c] sm:$0xf]
    %v1714 = vld [vmem:[%s6] sm:$0x1]
    %v1716 = vlaneseq
    %v1717 = vshrl.u32 %v1716, 7
    %v1718 = vsub.s32 0, %v1717
    %v1719 = vrot.slane %v1714, %v1718
    %v1753 = vunpack.c.l.b16 %v1682
    %v1754 = vunpack.c.l.b16 %v1683
    %v1755 = vunpack.c.l.b16 %v1684
    %v1756 = vunpack.c.l.b16 %v1685
    %v1757 = vunpack.c.l.b16 %v1686
    %v1758 = vunpack.c.l.b16 %v1687
    %v1759 = vunpack.c.l.b16 %v1688
    %v1760 = vunpack.c.l.b16 %v1689
    %v1761 = vunpack.c.l.b16 %v1690
    %v1762 = vunpack.c.l.b16 %v1691
    %v1763 = vunpack.c.l.b16 %v1692
    %v1764 = vunpack.c.l.b16 %v1693
    %v1765 = vunpack.c.l.b16 %v1694
    %v1766 = vunpack.c.l.b16 %v1695
    %v1767 = vunpack.c.l.b16 %v1696
    %v1768 = vunpack.c.l.b16 %v1697
    %v1769 = vunpack.c.l.b16 %v1698
    %v1770 = vunpack.c.l.b16 %v1699
    %v1771 = vunpack.c.l.b16 %v1700
    %v1772 = vunpack.c.l.b16 %v1701
    %v1773 = vunpack.c.l.b16 %v1702
    %v1774 = vunpack.c.l.b16 %v1703
    %v1775 = vunpack.c.l.b16 %v1704
    %v1776 = vunpack.c.l.b16 %v1705
    %v1777 = vunpack.c.l.b16 %v1706
    %v1778 = vunpack.c.l.b16 %v1707
    %v1779 = vunpack.c.l.b16 %v1708
    %v1780 = vunpack.c.l.b16 %v1709
    %v1781 = vunpack.c.l.b16 %v1710
    %v1782 = vunpack.c.l.b16 %v1711
    %v1783 = vunpack.c.l.b16 %v1712
    %v1784 = vunpack.c.l.b16 %v1713
    %v1785 = vpack.c.b16 %v1754, %v1753
    %v1786 = vpack.c.b16 %v1756, %v1755
    %v1787 = vpack.c.b16 %v1758, %v1757
    %v1788 = vpack.c.b16 %v1760, %v1759
    %v1789 = vpack.c.b16 %v1762, %v1761
    %v1790 = vpack.c.b16 %v1764, %v1763
    %v1791 = vpack.c.b16 %v1766, %v1765
    %v1792 = vpack.c.b16 %v1768, %v1767
    %v1793 = vpack.c.b16 %v1770, %v1769
    %v1794 = vpack.c.b16 %v1772, %v1771
    %v1795 = vpack.c.b16 %v1774, %v1773
    %v1796 = vpack.c.b16 %v1776, %v1775
    %v1797 = vpack.c.b16 %v1778, %v1777
    %v1798 = vpack.c.b16 %v1780, %v1779
    %v1799 = vpack.c.b16 %v1782, %v1781
    %v1800 = vpack.c.b16 %v1784, %v1783
    %1817 = vmatprep.subr.bf16.mxu0 0
    %1818 = vmatpush1.bf16.msra.mxu0 %v1785
    %1819 = vmatprep.subr.bf16.mxu0 0
    %1820 = vmatpush1.bf16.msra.mxu0 %v1786
    %1821 = vmatprep.subr.bf16.mxu0 0
    %1822 = vmatpush1.bf16.msra.mxu0 %v1787
    %1823 = vmatprep.subr.bf16.mxu0 0
    %1824 = vmatpush1.bf16.msra.mxu0 %v1788
    %1825 = vmatprep.subr.bf16.mxu0 0
    %1826 = vmatpush1.bf16.msra.mxu0 %v1789
    %1827 = vmatprep.subr.bf16.mxu0 0
    %1828 = vmatpush1.bf16.msra.mxu0 %v1790
    %1829 = vmatprep.subr.bf16.mxu0 0
    %1830 = vmatpush1.bf16.msra.mxu0 %v1791
    %1831 = vmatprep.subr.bf16.mxu0 0
    %1832 = vmatpush1.bf16.msra.mxu0 %v1792
    %1833 = vmatprep.subr.bf16.mxu0 0
    %1834 = vmatpush1.bf16.msra.mxu0 %v1793
    %1835 = vmatprep.subr.bf16.mxu0 0
    %1836 = vmatpush1.bf16.msra.mxu0 %v1794
    %1837 = vmatprep.subr.bf16.mxu0 0
    %1838 = vmatpush1.bf16.msra.mxu0 %v1795
    %1839 = vmatprep.subr.bf16.mxu0 0
    %1840 = vmatpush1.bf16.msra.mxu0 %v1796
    %1841 = vmatprep.subr.bf16.mxu0 0
    %1842 = vmatpush1.bf16.msra.mxu0 %v1797
    %1843 = vmatprep.subr.bf16.mxu0 0
    %1844 = vmatpush1.bf16.msra.mxu0 %v1798
    %1845 = vmatprep.subr.bf16.mxu0 0
    %1846 = vmatpush1.bf16.msra.mxu0 %v1799
    %1847 = vmatprep.subr.bf16.mxu0 0
    %1848 = vmatpush1.bf16.msra.mxu0 %v1800
    %1849 = vmatprep.mubr.bf16.mxu0 %v1681
    %1850 = vmatmul.mubr.bf16.gmra.mrb[0].mxu0 %v1680
    %v1851 = vpop.f32.mrb[0].mxu0
    %v1852 = vadd.f32 %v1719, %v1851
    %v1853 = vpop.f32.mrb[0].mxu0
    %v1854 = vpop.f32.mrb[0].mxu0
    %v1855 = vadd.f32 %v1719, %v1854
    %v1856 = vpop.f32.mrb[0].mxu0
    %1857 = vdwg.mxu0
    %v1858 = vsub.f32 0.0, %v1852
    %v1859 = vsub.f32 0.0, %v1855
    %v1860 = vmul.f32 %v1858, 1.442695
    %v1861 = vpow.pop %v1860
    %v1862 = vmul.f32 %v1859, 1.442695
    %v1863 = vpow.pop %v1862
    %v1864 = vadd.f32 %v1861, 1.0
    %v1865 = vadd.f32 %v1863, 1.0
    %v1866 = vrcp.pop %v1864
    %v1867 = vrcp.pop %v1865
    %1868 = vst [vmem:[#allocation11] sm:$0xff] %v1866
    %1869 = vst [vmem:[#allocation11 + $0x8] sm:$0xff] %v1867
    // Predicated region
    $region50: #{tpu_custom_call.1} parent=1 // pred_check
      _
    $region51: #{tpu_custom_call.1} parent=1 // pred_check_branch
      %1871 = sbr.rel (0) target = $region53
    $region52: #{tpu_custom_call.1} parent=1 // pred_region
      %s1873 = ssub.s32 256, 256
      %1874 = vsyncadd [#allocation4], %s1873
      %s1875 = sshll.u32 [#allocation11], 4
      %s1876 = int_to_ptr.vmem [resolvable:$true] %s1875
      %1881 = dma.vmem_to_hbm [thread:$0]  %s1876, 256, %s7, [#allocation4], 128, 128, 8
    $region53: #{tpu_custom_call.1} parent=1 // pred_fallthru
      _
    // Predicated region
    $region54: #{tpu_custom_call.1} parent=1 // pred_check
      _
    $region55: #{tpu_custom_call.1} parent=1 // pred_check_branch
      %1883 = sbr.rel (0) target = $region57
    $region56: #{tpu_custom_call.1} parent=1 // pred_region
      %1884 = dma.done [#allocation4], 256
    $region57: #{tpu_custom_call.1} parent=1 // pred_fallthru
      _
    %1885 = vsyncpa [#allocation3], 1
    %1886 = vsyncpa [#allocation6], 1
    %1887 = vsyncpa [#allocation9], 1
    %1888 = vsyncpa [#allocation4], 1

</llo_original>
